<compile_context>
chip_gen: v5e
topology: v5e:2x2
jax: 0.10.0
libtpu: 0.0.40
codegen_flags: <defaults>
</compile_context>

<pallas_src>
import jax
import jax.numpy as jnp
from jax import lax
from jax.experimental import pallas as pl
from jax.experimental.pallas import tpu as pltpu


# ----------------------------- Pallas kernel ---------------------------------

def _self_attention_kernel(x_cm_ref, x_pm_ref, wq_ref, wk_ref, wv_ref,
                           bq_ref, bk_ref, bv_ref, g_ref, o_ref):
    # Per-batch-element fused self-attention.
    #   x_cm : (C, HW)   channel-major input (= flattened NCHW)
    #   x_pm : (HW, C)   pixel-major input
    #   wq   : (C, Cq)   wk: (Cq, C)   wv: (C, C)
    x_cm = x_cm_ref[...]
    x_pm = x_pm_ref[...]

    # 1x1 conv projections (conv1x1 == per-pixel matmul).
    q = jnp.dot(x_pm, wq_ref[...], preferred_element_type=jnp.float32) + bq_ref[...]   # (HW, Cq)
    k = jnp.dot(wk_ref[...], x_cm, preferred_element_type=jnp.float32) + bk_ref[...]   # (Cq, HW)
    v = jnp.dot(wv_ref[...], x_cm, preferred_element_type=jnp.float32) + bv_ref[...]   # (C,  HW)

    # energy[i, j] = q_i . k_j  -> softmax over j (matches torch.Softmax(dim=-1)).
    energy = jnp.dot(q, k, preferred_element_type=jnp.float32)                          # (HW, HW)
    m = jnp.max(energy, axis=-1, keepdims=True)
    e = jnp.exp(energy - m)
    attn = e / jnp.sum(e, axis=-1, keepdims=True)

    # out[c, i] = sum_j v[c, j] * attn[i, j]   (rhs-transposed matmul, stays channel-major)
    out = lax.dot_general(v, attn, (((1,), (1,)), ((), ())),
                          preferred_element_type=jnp.float32)                           # (C, HW)

    # residual: gamma * out + x   (lane-dense store: last dim = HW, multiple of 128)
    o_ref[...] = g_ref[...] * out + x_cm


def self_attention_forward(params, x_nchw):
    """Pallas forward for SelfAttention. x_nchw: (B, C, H, W) -> (B, C, H, W)."""
    B, C, H, W = x_nchw.shape
    HW = H * W
    Cq = params["wq"].shape[0]

    x_cm = x_nchw.reshape(B, C, HW).astype(jnp.float32)        # (B, C, HW)  channel-major
    x_pm = jnp.transpose(x_cm, (0, 2, 1))                      # (B, HW, C)  pixel-major

    wq_pm = jnp.transpose(params["wq"][:, :, 0, 0])            # (C, Cq)
    wk_cm = params["wk"][:, :, 0, 0]                           # (Cq, C)
    wv_cm = params["wv"][:, :, 0, 0]                           # (C, C)
    bq = params["bq"].reshape(1, Cq).astype(jnp.float32)
    bk = params["bk"].reshape(Cq, 1).astype(jnp.float32)
    bv = params["bv"].reshape(C, 1).astype(jnp.float32)
    gamma = params["gamma"].reshape(1, 1).astype(jnp.float32)

    # TODO(synk): for very large H*W (energy is HW x HW) this single-block kernel should
    # switch to a flash-attention style tiling over the key axis; fine at these sizes.
    out = pl.pallas_call(
        _self_attention_kernel,
        out_shape=jax.ShapeDtypeStruct((B, C, HW), jnp.float32),
        grid_spec=pltpu.PrefetchScalarGridSpec(
            num_scalar_prefetch=0,
            grid=(B,),
            in_specs=[
                pl.BlockSpec((None, C, HW), lambda b: (b, 0, 0)),   # x channel-major
                pl.BlockSpec((None, HW, C), lambda b: (b, 0, 0)),   # x pixel-major
                pl.BlockSpec((C, Cq), lambda b: (0, 0)),            # Wq
                pl.BlockSpec((Cq, C), lambda b: (0, 0)),            # Wk
                pl.BlockSpec((C, C), lambda b: (0, 0)),             # Wv
                pl.BlockSpec((1, Cq), lambda b: (0, 0)),            # bq
                pl.BlockSpec((Cq, 1), lambda b: (0, 0)),            # bk
                pl.BlockSpec((C, 1), lambda b: (0, 0)),             # bv
                pl.BlockSpec((1, 1), lambda b: (0, 0)),             # gamma
            ],
            out_specs=pl.BlockSpec((None, C, HW), lambda b: (b, 0, 0)),
        ),
        compiler_params=pltpu.CompilerParams(
            dimension_semantics=("parallel",),                      # v7x: one batch elem per TC
        ),
    )(x_cm, x_pm, wq_pm, wk_cm, wv_cm, bq, bk, bv, gamma)

    return out.reshape(B, C, H, W)


# ------------------------------ parameter setup --------------------------------

def spectral_normalize(w, dim, key, n_iter=1, eps=1e-12):
    """One deterministic power iteration, matching torch.nn.utils.spectral_norm (W / sigma)."""
    perm = (dim,) + tuple(d for d in range(w.ndim) if d != dim)
    wm = jnp.transpose(w, perm).reshape(w.shape[dim], -1)
    u = jax.random.normal(key, (wm.shape[0],), jnp.float32)
    u = u / (jnp.linalg.norm(u) + eps)
    v = None
    for _ in range(n_iter):
        v = wm.T @ u
        v = v / (jnp.linalg.norm(v) + eps)
        u = wm @ v
        u = u / (jnp.linalg.norm(u) + eps)
    sigma = u @ (wm @ v)
    return w / sigma


def init_self_attention_params(key, ch_in, sq_fact=8):
    cq = ch_in // sq_fact
    ks = jax.random.split(key, 6)
    wq = 0.1 * jax.random.normal(ks[0], (cq, ch_in, 1, 1), jnp.float32)      # Conv2d OIHW
    bq = 0.1 * jax.random.normal(ks[1], (cq,), jnp.float32)
    wk = 0.1 * jax.random.normal(ks[2], (cq, ch_in, 1, 1), jnp.float32)
    bk = 0.1 * jax.random.normal(ks[3], (cq,), jnp.float32)
    wv = 0.1 * jax.random.normal(ks[4], (ch_in, ch_in, 1, 1), jnp.float32)
    bv = 0.1 * jax.random.normal(ks[5], (ch_in,), jnp.float32)
    # spectral_norm: dim=0 (torch default for Conv2d)
    wq = spectral_normalize(wq, 0, jax.random.PRNGKey(11))
    wk = spectral_normalize(wk, 0, jax.random.PRNGKey(12))
    wv = spectral_normalize(wv, 0, jax.random.PRNGKey(13))
    # nn.Parameter(torch.zeros(1)) initializes gamma = 0; use a nonzero value here so the
    # attention path actually contributes to the output (forward formula is unchanged).
    gamma = jnp.array([0.5], jnp.float32)
    return dict(wq=wq, bq=bq, wk=wk, bk=bk, wv=wv, bv=bv, gamma=gamma)


# --------------------------- pure-JAX reference -------------------------------

def reference_forward(params, x):
    B, C, H, W = x.shape
    HW = H * W
    hp = lax.Precision.HIGHEST

    def conv1x1(w, b):
        return jnp.einsum("bchw,oc->bohw", x, w[:, :, 0, 0], precision=hp) \
            + b[None, :, None, None]

    q = conv1x1(params["wq"], params["bq"]).reshape(B, -1, HW)     # (B, Cq, HW)
    k = conv1x1(params["wk"], params["bk"]).reshape(B, -1, HW)     # (B, Cq, HW)
    v = conv1x1(params["wv"], params["bv"]).reshape(B, -1, HW)     # (B, C,  HW)

    pq = jnp.transpose(q, (0, 2, 1))                               # (B, HW, Cq)
    energy = jnp.einsum("bic,bcj->bij", pq, k, precision=hp)       # (B, HW, HW)
    attn = jax.nn.softmax(energy, axis=-1)
    out = jnp.einsum("bcj,bij->bci", v, attn, precision=hp)        # (B, C, HW)
    out = out.reshape(B, C, H, W)
    return params["gamma"][0] * out + x


# ----------------------------------- main --------------------------------------

if __name__ == "__main__":
    key = jax.random.PRNGKey(0)
    kx, kp = jax.random.split(key)

    ch_in, sq_fact = 32, 8            # ch_in must be >= sq_fact so ch_in // 8 >= 1
    x = jax.random.normal(kx, (2, ch_in, 16, 16), jnp.float32)

    params = init_self_attention_params(kp, ch_in, sq_fact)

    fwd = jax.jit(lambda xx: self_attention_forward(params, xx))
    out = jax.block_until_ready(fwd(x))
    assert out.shape == x.shape, out.shape

    ref = reference_forward(params, x)
    max_err = float(jnp.max(jnp.abs(out - ref)))
    assert jnp.allclose(out, ref, atol=2e-3, rtol=2e-3), f"max abs err = {max_err}"

    print("KERNEL_OK")
</pallas_src>

<mosaic_0001>
module attributes {stable_mosaic.version = 11 : i64} {
  func.func @_self_attention_kernel(%arg0: i32, %arg1: memref<1x32x256xf32, #tpu.memory_space<vmem>>, %arg2: memref<1x256x32xf32, #tpu.memory_space<vmem>>, %arg3: memref<32x4xf32, #tpu.memory_space<vmem>>, %arg4: memref<4x32xf32, #tpu.memory_space<vmem>>, %arg5: memref<32x32xf32, #tpu.memory_space<vmem>>, %arg6: memref<1x4xf32, #tpu.memory_space<vmem>>, %arg7: memref<4x1xf32, #tpu.memory_space<vmem>>, %arg8: memref<32x1xf32, #tpu.memory_space<vmem>>, %arg9: memref<1x1xf32, #tpu.memory_space<vmem>>, %arg10: memref<1x32x256xf32, #tpu.memory_space<vmem>>) attributes {dimension_semantics = [#tpu.dimension_semantics<parallel>], iteration_bounds = array<i64: 2>, scalar_prefetch = 0 : i64, scratch_operands = 0 : i64, tpu.core_type = #tpu.core_type<tc>, window_params = [{transform_indices = @transform_0, window_bounds = array<i64: 1, 32, 256>}, {transform_indices = @transform_1, window_bounds = array<i64: 1, 256, 32>}, {pipeline_mode = #tpu.pipeline_mode<synchronous>, transform_indices = @transform_2, window_bounds = array<i64: 32, 4>}, {pipeline_mode = #tpu.pipeline_mode<synchronous>, transform_indices = @transform_3, window_bounds = array<i64: 4, 32>}, {pipeline_mode = #tpu.pipeline_mode<synchronous>, transform_indices = @transform_4, window_bounds = array<i64: 32, 32>}, {pipeline_mode = #tpu.pipeline_mode<synchronous>, transform_indices = @transform_5, window_bounds = array<i64: 1, 4>}, {pipeline_mode = #tpu.pipeline_mode<synchronous>, transform_indices = @transform_6, window_bounds = array<i64: 4, 1>}, {pipeline_mode = #tpu.pipeline_mode<synchronous>, transform_indices = @transform_7, window_bounds = array<i64: 32, 1>}, {pipeline_mode = #tpu.pipeline_mode<synchronous>, transform_indices = @transform_8, window_bounds = array<i64: 1, 1>}, {transform_indices = @transform_9, window_bounds = array<i64: 1, 32, 256>}]} {
    %c0 = arith.constant 0 : index
    %c0_0 = arith.constant 0 : index
    %c0_1 = arith.constant 0 : index
    %0 = vector.load %arg1[%c0, %c0_0, %c0_1] : memref<1x32x256xf32, #tpu.memory_space<vmem>>, vector<1x32x256xf32>
    %1 = vector.shape_cast %0 : vector<1x32x256xf32> to vector<32x256xf32>
    %c0_2 = arith.constant 0 : index
    %c0_3 = arith.constant 0 : index
    %c0_4 = arith.constant 0 : index
    %2 = vector.load %arg2[%c0_2, %c0_3, %c0_4] : memref<1x256x32xf32, #tpu.memory_space<vmem>>, vector<1x256x32xf32>
    %3 = vector.shape_cast %2 : vector<1x256x32xf32> to vector<256x32xf32>
    %c0_5 = arith.constant 0 : index
    %c0_6 = arith.constant 0 : index
    %4 = vector.load %arg3[%c0_5, %c0_6] : memref<32x4xf32, #tpu.memory_space<vmem>>, vector<32x4xf32>
    %cst = arith.constant dense<0.000000e+00> : vector<256x4xf32>
    %5 = tpu.matmul %3, %4, %cst {dimension_numbers = #tpu.dot_dimension_numbers<[1], [0], [0], [1], [0, 0, 1, 1], [], []>} : vector<256x32xf32>, vector<32x4xf32>, vector<256x4xf32> -> vector<256x4xf32>
    %c0_7 = arith.constant 0 : index
    %c0_8 = arith.constant 0 : index
    %6 = vector.load %arg6[%c0_7, %c0_8] : memref<1x4xf32, #tpu.memory_space<vmem>>, vector<1x4xf32>
    %7 = vector.broadcast %6 : vector<1x4xf32> to vector<256x4xf32>
    %8 = arith.addf %5, %7 : vector<256x4xf32>
    %c0_9 = arith.constant 0 : index
    %c0_10 = arith.constant 0 : index
    %9 = vector.load %arg4[%c0_9, %c0_10] : memref<4x32xf32, #tpu.memory_space<vmem>>, vector<4x32xf32>
    %cst_11 = arith.constant dense<0.000000e+00> : vector<4x256xf32>
    %10 = tpu.matmul %9, %1, %cst_11 {dimension_numbers = #tpu.dot_dimension_numbers<[1], [0], [0], [1], [0, 0, 1, 1], [], []>} : vector<4x32xf32>, vector<32x256xf32>, vector<4x256xf32> -> vector<4x256xf32>
    %c0_12 = arith.constant 0 : index
    %c0_13 = arith.constant 0 : index
    %11 = vector.load %arg7[%c0_12, %c0_13] : memref<4x1xf32, #tpu.memory_space<vmem>>, vector<4x1xf32>
    %12 = vector.broadcast %11 : vector<4x1xf32> to vector<4x256xf32>
    %13 = arith.addf %10, %12 : vector<4x256xf32>
    %c0_14 = arith.constant 0 : index
    %c0_15 = arith.constant 0 : index
    %14 = vector.load %arg5[%c0_14, %c0_15] : memref<32x32xf32, #tpu.memory_space<vmem>>, vector<32x32xf32>
    %cst_16 = arith.constant dense<0.000000e+00> : vector<32x256xf32>
    %15 = tpu.matmul %14, %1, %cst_16 {dimension_numbers = #tpu.dot_dimension_numbers<[1], [0], [0], [1], [0, 0, 1, 1], [], []>} : vector<32x32xf32>, vector<32x256xf32>, vector<32x256xf32> -> vector<32x256xf32>
    %c0_17 = arith.constant 0 : index
    %c0_18 = arith.constant 0 : index
    %16 = vector.load %arg8[%c0_17, %c0_18] : memref<32x1xf32, #tpu.memory_space<vmem>>, vector<32x1xf32>
    %17 = vector.broadcast %16 : vector<32x1xf32> to vector<32x256xf32>
    %18 = arith.addf %15, %17 : vector<32x256xf32>
    %cst_19 = arith.constant dense<0.000000e+00> : vector<256x256xf32>
    %19 = tpu.matmul %8, %13, %cst_19 {dimension_numbers = #tpu.dot_dimension_numbers<[1], [0], [0], [1], [0, 0, 1, 1], [], []>} : vector<256x4xf32>, vector<4x256xf32>, vector<256x256xf32> -> vector<256x256xf32>
    %cst_20 = arith.constant dense<0xFF800000> : vector<256xf32>
    %20 = vector.multi_reduction <maximumf>, %19, %cst_20 [1] : vector<256x256xf32> to vector<256xf32>
    %21 = vector.shape_cast %20 : vector<256xf32> to vector<256x1xf32>
    %22 = vector.broadcast %21 : vector<256x1xf32> to vector<256x256xf32>
    %23 = arith.subf %19, %22 : vector<256x256xf32>
    %24 = math.exp %23 : vector<256x256xf32>
    %cst_21 = arith.constant dense<0.000000e+00> : vector<256xf32>
    %25 = vector.multi_reduction <add>, %24, %cst_21 [1] : vector<256x256xf32> to vector<256xf32>
    %26 = vector.shape_cast %25 : vector<256xf32> to vector<256x1xf32>
    %27 = vector.broadcast %26 : vector<256x1xf32> to vector<256x256xf32>
    %28 = arith.divf %24, %27 : vector<256x256xf32>
    %cst_22 = arith.constant dense<0.000000e+00> : vector<32x256xf32>
    %29 = tpu.matmul %18, %28, %cst_22 {dimension_numbers = #tpu.dot_dimension_numbers<[1], [1], [0], [0], [0, 0, 1, 0], [], []>} : vector<32x256xf32>, vector<256x256xf32>, vector<32x256xf32> -> vector<32x256xf32>
    %c0_23 = arith.constant 0 : index
    %c0_24 = arith.constant 0 : index
    %30 = vector.load %arg9[%c0_23, %c0_24] : memref<1x1xf32, #tpu.memory_space<vmem>>, vector<1x1xf32>
    %31 = vector.broadcast %30 : vector<1x1xf32> to vector<32x256xf32>
    %32 = arith.mulf %31, %29 : vector<32x256xf32>
    %33 = arith.addf %32, %1 : vector<32x256xf32>
    %c0_25 = arith.constant 0 : index
    %c0_26 = arith.constant 0 : index
    %c0_27 = arith.constant 0 : index
    %34 = vector.load %arg10[%c0_25, %c0_26, %c0_27] : memref<1x32x256xf32, #tpu.memory_space<vmem>>, vector<1x32x256xf32>
    %35 = vector.shape_cast %34 : vector<1x32x256xf32> to vector<32x256xf32>
    %36 = vector.shape_cast %33 : vector<32x256xf32> to vector<1x32x256xf32>
    tpu.vector_store %arg10[%c0_25, %c0_26, %c0_27], %36 {strides = array<i32>} : memref<1x32x256xf32, #tpu.memory_space<vmem>>, vector<1x32x256xf32>,
    return
  }
  func.func @transform_0(%arg0: i32) -> (i32, i32, i32) {
    %c0_i32 = arith.constant 0 : i32
    %c0_i32_0 = arith.constant 0 : i32
    %c0_i32_1 = arith.constant 0 : i32
    return %arg0, %c0_i32, %c0_i32_0 : i32, i32, i32
  }
  func.func @transform_1(%arg0: i32) -> (i32, i32, i32) {
    %c0_i32 = arith.constant 0 : i32
    %c0_i32_0 = arith.constant 0 : i32
    %c0_i32_1 = arith.constant 0 : i32
    return %arg0, %c0_i32, %c0_i32_0 : i32, i32, i32
  }
  func.func @transform_2(%arg0: i32) -> (i32, i32) {
    %c0_i32 = arith.constant 0 : i32
    %c0_i32_0 = arith.constant 0 : i32
    %c0_i32_1 = arith.constant 0 : i32
    return %c0_i32, %c0_i32_0 : i32, i32
  }
  func.func @transform_3(%arg0: i32) -> (i32, i32) {
    %c0_i32 = arith.constant 0 : i32
    %c0_i32_0 = arith.constant 0 : i32
    %c0_i32_1 = arith.constant 0 : i32
    return %c0_i32, %c0_i32_0 : i32, i32
  }
  func.func @transform_4(%arg0: i32) -> (i32, i32) {
    %c0_i32 = arith.constant 0 : i32
    %c0_i32_0 = arith.constant 0 : i32
    %c0_i32_1 = arith.constant 0 : i32
    return %c0_i32, %c0_i32_0 : i32, i32
  }
  func.func @transform_5(%arg0: i32) -> (i32, i32) {
    %c0_i32 = arith.constant 0 : i32
    %c0_i32_0 = arith.constant 0 : i32
    %c0_i32_1 = arith.constant 0 : i32
    return %c0_i32, %c0_i32_0 : i32, i32
  }
  func.func @transform_6(%arg0: i32) -> (i32, i32) {
    %c0_i32 = arith.constant 0 : i32
    %c0_i32_0 = arith.constant 0 : i32
    %c0_i32_1 = arith.constant 0 : i32
    return %c0_i32, %c0_i32_0 : i32, i32
  }
  func.func @transform_7(%arg0: i32) -> (i32, i32) {
    %c0_i32 = arith.constant 0 : i32
    %c0_i32_0 = arith.constant 0 : i32
    %c0_i32_1 = arith.constant 0 : i32
    return %c0_i32, %c0_i32_0 : i32, i32
  }
  func.func @transform_8(%arg0: i32) -> (i32, i32) {
    %c0_i32 = arith.constant 0 : i32
    %c0_i32_0 = arith.constant 0 : i32
    %c0_i32_1 = arith.constant 0 : i32
    return %c0_i32, %c0_i32_0 : i32, i32
  }
  func.func @transform_9(%arg0: i32) -> (i32, i32, i32) {
    %c0_i32 = arith.constant 0 : i32
    %c0_i32_0 = arith.constant 0 : i32
    %c0_i32_1 = arith.constant 0 : i32
    return %arg0, %c0_i32, %c0_i32_0 : i32, i32, i32
  }
}

</mosaic_0001>

<llo_original>
// kernel: _lambda_.1
$region0: #{_lambda_.1}
  #allocation0 [shape = 'u32[]', space=smem, size = 0x4, offset = 0x4, fixed_abs, tag = 'smem constant byte address 0x4 - core index']
  #allocation1 [shape = 'u32[72,128]{1,0:T(1,128)}', space=vmem, size = 0x9000, scoped, tag = 'internal scratch']
  #allocation2 [shape = 'f32[1,1]{1,0:T(1,128)S(1)}', space=vmem, size = 0x200, scoped, tag = 'scoped memory for _lambda_.1']
  %s0 = inlined_call_operand.vmem [shape: f32[2,32,256], index: 0, kind: input, shape index: {}]
  %s1 = inlined_call_operand.vmem [shape: f32[2,256,32], index: 1, kind: input, shape index: {}]
  %s2 = inlined_call_operand.vmem [shape: f32[32,4], index: 2, kind: input, shape index: {}]
  %s3 = inlined_call_operand.vmem [shape: f32[4,32], index: 3, kind: input, shape index: {}]
  %s4 = inlined_call_operand.vmem [shape: f32[32,32], index: 4, kind: input, shape index: {}]
  %s5 = inlined_call_operand.vmem [shape: f32[1,4], index: 5, kind: input, shape index: {}]
  %s6 = inlined_call_operand.vmem [shape: f32[4,1], index: 6, kind: input, shape index: {}]
  %s7 = inlined_call_operand.vmem [shape: f32[32,1], index: 7, kind: input, shape index: {}]
  %s8 = inlined_call_operand.<no memory space> [shape: f32[1,1], index: 8, kind: input, shape index: {}]
  %s9 = inlined_call_operand.vmem [shape: f32[2,32,256], index: 9, kind: output, shape index: {}]
  %s10 = sld [smem:[#allocation0]]
  $region69: #{_lambda_.1} parent=0
    _
  %s12 = ssub.s32 1, %s10
  %s13 = scalar_select 0, %s12, %s10
  %v14 = vstv %s8
  %15 = vst [vmem:[#allocation2] sm:$0x1] %v14
  loop: start=0, step=1, limit=4
  $region2: #{_lambda_.1} parent=0 // loop_pre_header
    _
  $region3: #{_lambda_.1} parent=0 // loop_header
    %s17 = sphi 0, %s21
    %p18 = scmp.ge.s32.totalorder %s17, 4
    %s27 = sphi 0, %s29
    %s30 = sphi 0, %s27
    %s31 = sphi 0, %s30
    %s47 = sphi 0, %s31
    %s53 = sphi 0, %s55
    %s56 = sphi 0, %s53
    %s57 = sphi 0, %s56
    %s73 = sphi 0, %s57
    %s77 = sphi 0, %s77
    %s79 = sphi 0, %s77
    %s80 = sphi 0, %s79
    %s94 = sphi 0, %s80
    %s98 = sphi 0, %s98
    %s100 = sphi 0, %s98
    %s101 = sphi 0, %s100
    %s115 = sphi 0, %s101
    %s119 = sphi 0, %s119
    %s121 = sphi 0, %s119
    %s122 = sphi 0, %s121
    %s136 = sphi 0, %s122
    %s140 = sphi 0, %s140
    %s142 = sphi 0, %s140
    %s143 = sphi 0, %s142
    %s157 = sphi 0, %s143
    %s161 = sphi 0, %s161
    %s163 = sphi 0, %s161
    %s164 = sphi 0, %s163
    %s178 = sphi 0, %s164
    %s182 = sphi 0, %s182
    %s184 = sphi 0, %s182
    %s185 = sphi 0, %s184
    %s199 = sphi 0, %s185
    %s203 = sphi 0, %s203
    %s205 = sphi 0, %s203
    %s206 = sphi 0, %s205
    %s220 = sphi 0, %s206
    %s226 = sphi 0, %s228
    %s229 = sphi 0, %s226
    %s230 = sphi 0, %s229
    %s246 = sphi 0, %s230
  $region4: #{_lambda_.1} parent=0 // loop_header_branch
    %20 = sbr.rel (%p18) target = $region8
  $region5: #{_lambda_.1} parent=0 // loop_body
    %s22 = ssub.s32 %s17, 1
    %s23 = ssub.s32 %s17, 2
    %s24 = sadd.s32 %s17, 1
    %s25 = ssub.s32 %s17, %s24
    %p26 = scmp.eq.s32.totalorder %s25, 0
    %s28 = sadd.s32 %s27, 1
    %s29 = scalar_select %p26, %s27, %s28
    %p32 = pneg %p26
    %p33 = scmp.eq.s32.totalorder %s17, 1
    %p34 = por %p32, %p33
    %p35 = scmp.ne.s32.totalorder %s27, %s30
    %p36 = scmp.eq.s32.totalorder %s17, 0
    %p37 = por %p35, %p36
    %p38 = scmp.ne.s32.totalorder %s27, %s30
    %p39 = scmp.eq.s32.totalorder %s22, 1
    %p40 = por %p38, %p39
    %p41 = scmp.ne.s32.totalorder %s30, %s31
    %p42 = scmp.eq.s32.totalorder %s22, 0
    %p43 = por %p41, %p42
    %p44 = scmp.ne.s32.totalorder %s30, %s31
    %p45 = scmp.eq.s32.totalorder %s23, 1
    %p46 = por %p44, %p45
    %p48 = scmp.ne.s32.totalorder %s31, %s47
    %p49 = scmp.eq.s32.totalorder %s23, 0
    %p50 = por %p48, %p49
    %s51 = ssub.s32 %s17, %s24
    %p52 = scmp.eq.s32.totalorder %s51, 0
    %s54 = sadd.s32 %s53, 1
    %s55 = scalar_select %p52, %s53, %s54
    %p58 = pneg %p52
    %p59 = scmp.eq.s32.totalorder %s17, 1
    %p60 = por %p58, %p59
    %p61 = scmp.ne.s32.totalorder %s53, %s56
    %p62 = scmp.eq.s32.totalorder %s17, 0
    %p63 = por %p61, %p62
    %p64 = scmp.ne.s32.totalorder %s53, %s56
    %p65 = scmp.eq.s32.totalorder %s22, 1
    %p66 = por %p64, %p65
    %p67 = scmp.ne.s32.totalorder %s56, %s57
    %p68 = scmp.eq.s32.totalorder %s22, 0
    %p69 = por %p67, %p68
    %p70 = scmp.ne.s32.totalorder %s56, %s57
    %p71 = scmp.eq.s32.totalorder %s23, 1
    %p72 = por %p70, %p71
    %p74 = scmp.ne.s32.totalorder %s57, %s73
    %p75 = scmp.eq.s32.totalorder %s23, 0
    %p76 = por %p74, %p75
    %s78 = sadd.s32 %s77, 1
    %p81 = scmp.eq.s32.totalorder %s17, 1
    %p82 = scmp.ne.s32.totalorder %s77, %s79
    %p83 = scmp.eq.s32.totalorder %s17, 0
    %p84 = por %p82, %p83
    %p85 = scmp.ne.s32.totalorder %s77, %s79
    %p86 = scmp.eq.s32.totalorder %s22, 1
    %p87 = por %p85, %p86
    %p88 = scmp.ne.s32.totalorder %s79, %s80
    %p89 = scmp.eq.s32.totalorder %s22, 0
    %p90 = por %p88, %p89
    %p91 = scmp.ne.s32.totalorder %s79, %s80
    %p92 = scmp.eq.s32.totalorder %s23, 1
    %p93 = por %p91, %p92
    %p95 = scmp.ne.s32.totalorder %s80, %s94
    %p96 = scmp.eq.s32.totalorder %s23, 0
    %p97 = por %p95, %p96
    %s99 = sadd.s32 %s98, 1
    %p102 = scmp.eq.s32.totalorder %s17, 1
    %p103 = scmp.ne.s32.totalorder %s98, %s100
    %p104 = scmp.eq.s32.totalorder %s17, 0
    %p105 = por %p103, %p104
    %p106 = scmp.ne.s32.totalorder %s98, %s100
    %p107 = scmp.eq.s32.totalorder %s22, 1
    %p108 = por %p106, %p107
    %p109 = scmp.ne.s32.totalorder %s100, %s101
    %p110 = scmp.eq.s32.totalorder %s22, 0
    %p111 = por %p109, %p110
    %p112 = scmp.ne.s32.totalorder %s100, %s101
    %p113 = scmp.eq.s32.totalorder %s23, 1
    %p114 = por %p112, %p113
    %p116 = scmp.ne.s32.totalorder %s101, %s115
    %p117 = scmp.eq.s32.totalorder %s23, 0
    %p118 = por %p116, %p117
    %s120 = sadd.s32 %s119, 1
    %p123 = scmp.eq.s32.totalorder %s17, 1
    %p124 = scmp.ne.s32.totalorder %s119, %s121
    %p125 = scmp.eq.s32.totalorder %s17, 0
    %p126 = por %p124, %p125
    %p127 = scmp.ne.s32.totalorder %s119, %s121
    %p128 = scmp.eq.s32.totalorder %s22, 1
    %p129 = por %p127, %p128
    %p130 = scmp.ne.s32.totalorder %s121, %s122
    %p131 = scmp.eq.s32.totalorder %s22, 0
    %p132 = por %p130, %p131
    %p133 = scmp.ne.s32.totalorder %s121, %s122
    %p134 = scmp.eq.s32.totalorder %s23, 1
    %p135 = por %p133, %p134
    %p137 = scmp.ne.s32.totalorder %s122, %s136
    %p138 = scmp.eq.s32.totalorder %s23, 0
    %p139 = por %p137, %p138
    %s141 = sadd.s32 %s140, 1
    %p144 = scmp.eq.s32.totalorder %s17, 1
    %p145 = scmp.ne.s32.totalorder %s140, %s142
    %p146 = scmp.eq.s32.totalorder %s17, 0
    %p147 = por %p145, %p146
    %p148 = scmp.ne.s32.totalorder %s140, %s142
    %p149 = scmp.eq.s32.totalorder %s22, 1
    %p150 = por %p148, %p149
    %p151 = scmp.ne.s32.totalorder %s142, %s143
    %p152 = scmp.eq.s32.totalorder %s22, 0
    %p153 = por %p151, %p152
    %p154 = scmp.ne.s32.totalorder %s142, %s143
    %p155 = scmp.eq.s32.totalorder %s23, 1
    %p156 = por %p154, %p155
    %p158 = scmp.ne.s32.totalorder %s143, %s157
    %p159 = scmp.eq.s32.totalorder %s23, 0
    %p160 = por %p158, %p159
    %s162 = sadd.s32 %s161, 1
    %p165 = scmp.eq.s32.totalorder %s17, 1
    %p166 = scmp.ne.s32.totalorder %s161, %s163
    %p167 = scmp.eq.s32.totalorder %s17, 0
    %p168 = por %p166, %p167
    %p169 = scmp.ne.s32.totalorder %s161, %s163
    %p170 = scmp.eq.s32.totalorder %s22, 1
    %p171 = por %p169, %p170
    %p172 = scmp.ne.s32.totalorder %s163, %s164
    %p173 = scmp.eq.s32.totalorder %s22, 0
    %p174 = por %p172, %p173
    %p175 = scmp.ne.s32.totalorder %s163, %s164
    %p176 = scmp.eq.s32.totalorder %s23, 1
    %p177 = por %p175, %p176
    %p179 = scmp.ne.s32.totalorder %s164, %s178
    %p180 = scmp.eq.s32.totalorder %s23, 0
    %p181 = por %p179, %p180
    %s183 = sadd.s32 %s182, 1
    %p186 = scmp.eq.s32.totalorder %s17, 1
    %p187 = scmp.ne.s32.totalorder %s182, %s184
    %p188 = scmp.eq.s32.totalorder %s17, 0
    %p189 = por %p187, %p188
    %p190 = scmp.ne.s32.totalorder %s182, %s184
    %p191 = scmp.eq.s32.totalorder %s22, 1
    %p192 = por %p190, %p191
    %p193 = scmp.ne.s32.totalorder %s184, %s185
    %p194 = scmp.eq.s32.totalorder %s22, 0
    %p195 = por %p193, %p194
    %p196 = scmp.ne.s32.totalorder %s184, %s185
    %p197 = scmp.eq.s32.totalorder %s23, 1
    %p198 = por %p196, %p197
    %p200 = scmp.ne.s32.totalorder %s185, %s199
    %p201 = scmp.eq.s32.totalorder %s23, 0
    %p202 = por %p200, %p201
    %s204 = sadd.s32 %s203, 1
    %p207 = scmp.eq.s32.totalorder %s17, 1
    %p208 = scmp.ne.s32.totalorder %s203, %s205
    %p209 = scmp.eq.s32.totalorder %s17, 0
    %p210 = por %p208, %p209
    %p211 = scmp.ne.s32.totalorder %s203, %s205
    %p212 = scmp.eq.s32.totalorder %s22, 1
    %p213 = por %p211, %p212
    %p214 = scmp.ne.s32.totalorder %s205, %s206
    %p215 = scmp.eq.s32.totalorder %s22, 0
    %p216 = por %p214, %p215
    %p217 = scmp.ne.s32.totalorder %s205, %s206
    %p218 = scmp.eq.s32.totalorder %s23, 1
    %p219 = por %p217, %p218
    %p221 = scmp.ne.s32.totalorder %s206, %s220
    %p222 = scmp.eq.s32.totalorder %s23, 0
    %p223 = por %p221, %p222
    %s224 = ssub.s32 %s17, %s24
    %p225 = scmp.eq.s32.totalorder %s224, 0
    %s227 = sadd.s32 %s226, 1
    %s228 = scalar_select %p225, %s226, %s227
    %p231 = pneg %p225
    %p232 = scmp.eq.s32.totalorder %s17, 1
    %p233 = por %p231, %p232
    %p234 = scmp.ne.s32.totalorder %s226, %s229
    %p235 = scmp.eq.s32.totalorder %s17, 0
    %p236 = por %p234, %p235
    %p237 = scmp.ne.s32.totalorder %s226, %s229
    %p238 = scmp.eq.s32.totalorder %s22, 1
    %p239 = por %p237, %p238
    %p240 = scmp.ne.s32.totalorder %s229, %s230
    %p241 = scmp.eq.s32.totalorder %s22, 0
    %p242 = por %p240, %p241
    %p243 = scmp.ne.s32.totalorder %s229, %s230
    %p244 = scmp.eq.s32.totalorder %s23, 1
    %p245 = por %p243, %p244
    %p247 = scmp.ne.s32.totalorder %s230, %s246
    %p248 = scmp.eq.s32.totalorder %s23, 0
    %p249 = por %p247, %p248
    %p250 = scmp.le.s32.totalorder 1, %s17
    %p251 = scmp.lt.s32.totalorder %s17, 3
    %p252 = pnand %p250, %p251
    %p253 = pneg %p252
    // Predicated region
    $region9: #{_lambda_.1} parent=5 // pred_check
      _
    $region10: #{_lambda_.1} parent=5 // pred_check_branch
      %255 = sbr.rel (%p252) target = $region12
    $region11: #{_lambda_.1} parent=5 // pred_region
      %s256 = ssub.s32 %s17, 1
      // Predicated region
      $region13: #{_lambda_.1} parent=11 // pred_check
        %p257 = pneg %p90
      $region14: #{_lambda_.1} parent=11 // pred_check_branch
        %259 = sbr.rel (%p257) target = $region16
      $region15: #{_lambda_.1} parent=11 // pred_region
        _
      $region16: #{_lambda_.1} parent=11 // pred_fallthru
        _
      // Predicated region
      $region17: #{_lambda_.1} parent=11 // pred_check
        %p260 = pneg %p111
      $region18: #{_lambda_.1} parent=11 // pred_check_branch
        %262 = sbr.rel (%p260) target = $region20
      $region19: #{_lambda_.1} parent=11 // pred_region
        _
      $region20: #{_lambda_.1} parent=11 // pred_fallthru
        _
      // Predicated region
      $region21: #{_lambda_.1} parent=11 // pred_check
        %p263 = pneg %p132
      $region22: #{_lambda_.1} parent=11 // pred_check_branch
        %265 = sbr.rel (%p263) target = $region24
      $region23: #{_lambda_.1} parent=11 // pred_region
        _
      $region24: #{_lambda_.1} parent=11 // pred_fallthru
        _
      // Predicated region
      $region25: #{_lambda_.1} parent=11 // pred_check
        %p266 = pneg %p153
      $region26: #{_lambda_.1} parent=11 // pred_check_branch
        %268 = sbr.rel (%p266) target = $region28
      $region27: #{_lambda_.1} parent=11 // pred_region
        _
      $region28: #{_lambda_.1} parent=11 // pred_fallthru
        _
      // Predicated region
      $region29: #{_lambda_.1} parent=11 // pred_check
        %p269 = pneg %p174
      $region30: #{_lambda_.1} parent=11 // pred_check_branch
        %271 = sbr.rel (%p269) target = $region32
      $region31: #{_lambda_.1} parent=11 // pred_region
        _
      $region32: #{_lambda_.1} parent=11 // pred_fallthru
        _
      // Predicated region
      $region33: #{_lambda_.1} parent=11 // pred_check
        %p272 = pneg %p195
      $region34: #{_lambda_.1} parent=11 // pred_check_branch
        %274 = sbr.rel (%p272) target = $region36
      $region35: #{_lambda_.1} parent=11 // pred_region
        _
      $region36: #{_lambda_.1} parent=11 // pred_fallthru
        _
      // Predicated region
      $region37: #{_lambda_.1} parent=11 // pred_check
        %p275 = pneg %p216
      $region38: #{_lambda_.1} parent=11 // pred_check_branch
        %277 = sbr.rel (%p275) target = $region40
      $region39: #{_lambda_.1} parent=11 // pred_region
        _
      $region40: #{_lambda_.1} parent=11 // pred_fallthru
        _
    $region12: #{_lambda_.1} parent=5 // pred_fallthru
      _
    %p278 = scmp.lt.s32.totalorder %s17, 2
    // Predicated region
    $region41: #{_lambda_.1} parent=5 // pred_check
      %p279 = pneg %p278
    $region42: #{_lambda_.1} parent=5 // pred_check_branch
      %281 = sbr.rel (%p279) target = $region44
    $region43: #{_lambda_.1} parent=5 // pred_region
      // Predicated region
      $region45: #{_lambda_.1} parent=43 // pred_check
        %p282 = pneg %p37
      $region46: #{_lambda_.1} parent=43 // pred_check_branch
        %284 = sbr.rel (%p282) target = $region48
      $region47: #{_lambda_.1} parent=43 // pred_region
        %p285 = scmp.lt.s32.totalorder %s17, 1
        %s286 = scalar_select %p285, %s17, 1
        %s287 = smul.addr %s286, 8
        %s288 = smul.addr %s287, 8
        %s289 = scalar_lea.vmem %s0, %s288
      $region48: #{_lambda_.1} parent=43 // pred_fallthru
        _
      // Predicated region
      $region49: #{_lambda_.1} parent=43 // pred_check
        %p290 = pneg %p63
      $region50: #{_lambda_.1} parent=43 // pred_check_branch
        %292 = sbr.rel (%p290) target = $region52
      $region51: #{_lambda_.1} parent=43 // pred_region
        %p293 = scmp.lt.s32.totalorder %s17, 1
        %s294 = scalar_select %p293, %s17, 1
        %s295 = smul.addr %s294, 32
        %s296 = smul.addr %s295, 8
        %s297 = scalar_lea.vmem %s1, %s296
      $region52: #{_lambda_.1} parent=43 // pred_fallthru
        _
    $region44: #{_lambda_.1} parent=5 // pred_fallthru
      _
    %p298 = scmp.le.s32.totalorder 1, %s17
    %p299 = scmp.lt.s32.totalorder %s17, 3
    %p300 = pnand %p298, %p299
    %p301 = pneg %p300
    // Predicated region
    $region53: #{_lambda_.1} parent=5 // pred_check
      _
    $region54: #{_lambda_.1} parent=5 // pred_check_branch
      %303 = sbr.rel (%p300) target = $region56
    $region55: #{_lambda_.1} parent=5 // pred_region
      %s304 = ssub.s32 %s17, 1
      %p305 = scmp.lt.s32.totalorder %s22, 1
      %s306 = scalar_select %p305, %s22, 1
      %s307 = smul.addr %s306, 8
      %s308 = smul.addr %s307, 8
      %s309 = scalar_lea.vmem %s0, %s308
      %p310 = pneg %p43
      %p311 = pneg %p40
      %p312 = scmp.lt.s32.totalorder %s22, 1
      %s313 = scalar_select %p312, %s22, 1
      %s314 = smul.addr %s313, 32
      %s315 = smul.addr %s314, 8
      %s316 = scalar_lea.vmem %s1, %s315
      %p317 = pneg %p69
      %p318 = pneg %p66
      %p319 = pneg %p90
      %p320 = pneg %p87
      %p321 = pneg %p111
      %p322 = pneg %p108
      %p323 = pneg %p132
      %p324 = pneg %p129
      %p325 = pneg %p153
      %p326 = pneg %p150
      %p327 = pneg %p174
      %p328 = pneg %p171
      %p329 = pneg %p195
      %p330 = pneg %p192
      %p331 = pneg %p216
      %p332 = pneg %p213
      %p333 = pneg %p242
      %p334 = pneg %p239
      %p335 = scmp.lt.s32.totalorder %s22, 1
      %s336 = scalar_select %p335, %s22, 1
      %s337 = smul.addr %s336, 8
      %s338 = smul.addr %s337, 8
      %s339 = scalar_lea.vmem %s9, %s338
      %p340 = scmp.lt.s32.totalorder %s22, 1
      %s341 = scalar_select %p340, %s22, 1
      %s342 = smul.addr %s341, 8
      %s343 = smul.addr %s342, 8
      %s344 = scalar_lea.vmem %s0, %s343
      %p345 = scmp.lt.s32.totalorder %s22, 1
      %s346 = scalar_select %p345, %s22, 1
      %s347 = smul.addr %s346, 32
      %s348 = smul.addr %s347, 8
      %s349 = scalar_lea.vmem %s1, %s348
      %p350 = scmp.lt.s32.totalorder %s22, 1
      %s351 = scalar_select %p350, %s22, 1
      %s352 = smul.addr %s351, 8
      %s353 = smul.addr %s352, 8
      %s354 = scalar_lea.vmem %s9, %s353
      %v355 = vld [vmem:[%s344] sm:$0xff]
      %v356 = vld [vmem:[%s344 + $0x8] sm:$0xff]
      %v357 = vld [vmem:[%s344 + $0x10] sm:$0xff]
      %v358 = vld [vmem:[%s344 + $0x18] sm:$0xff]
      %v359 = vld [vmem:[%s344 + $0x20] sm:$0xff]
      %v360 = vld [vmem:[%s344 + $0x28] sm:$0xff]
      %v361 = vld [vmem:[%s344 + $0x30] sm:$0xff]
      %v362 = vld [vmem:[%s344 + $0x38] sm:$0xff]
      %v363 = vld [vmem:[%s349] sm:$0xff]
      %v364 = vld [vmem:[%s349 + $0x8] sm:$0xff]
      %v365 = vld [vmem:[%s349 + $0x10] sm:$0xff]
      %v366 = vld [vmem:[%s349 + $0x18] sm:$0xff]
      %v367 = vld [vmem:[%s349 + $0x20] sm:$0xff]
      %v368 = vld [vmem:[%s349 + $0x28] sm:$0xff]
      %v369 = vld [vmem:[%s349 + $0x30] sm:$0xff]
      %v370 = vld [vmem:[%s349 + $0x38] sm:$0xff]
      %v371 = vld [vmem:[%s349 + $0x40] sm:$0xff]
      %v372 = vld [vmem:[%s349 + $0x48] sm:$0xff]
      %v373 = vld [vmem:[%s349 + $0x50] sm:$0xff]
      %v374 = vld [vmem:[%s349 + $0x58] sm:$0xff]
      %v375 = vld [vmem:[%s349 + $0x60] sm:$0xff]
      %v376 = vld [vmem:[%s349 + $0x68] sm:$0xff]
      %v377 = vld [vmem:[%s349 + $0x70] sm:$0xff]
      %v378 = vld [vmem:[%s349 + $0x78] sm:$0xff]
      %v379 = vld [vmem:[%s349 + $0x80] sm:$0xff]
      %v380 = vld [vmem:[%s349 + $0x88] sm:$0xff]
      %v381 = vld [vmem:[%s349 + $0x90] sm:$0xff]
      %v382 = vld [vmem:[%s349 + $0x98] sm:$0xff]
      %v383 = vld [vmem:[%s349 + $0xa0] sm:$0xff]
      %v384 = vld [vmem:[%s349 + $0xa8] sm:$0xff]
      %v385 = vld [vmem:[%s349 + $0xb0] sm:$0xff]
      %v386 = vld [vmem:[%s349 + $0xb8] sm:$0xff]
      %v387 = vld [vmem:[%s349 + $0xc0] sm:$0xff]
      %v388 = vld [vmem:[%s349 + $0xc8] sm:$0xff]
      %v389 = vld [vmem:[%s349 + $0xd0] sm:$0xff]
      %v390 = vld [vmem:[%s349 + $0xd8] sm:$0xff]
      %v391 = vld [vmem:[%s349 + $0xe0] sm:$0xff]
      %v392 = vld [vmem:[%s349 + $0xe8] sm:$0xff]
      %v393 = vld [vmem:[%s349 + $0xf0] sm:$0xff]
      %v394 = vld [vmem:[%s349 + $0xf8] sm:$0xff]
      %v395 = vld [vmem:[%s2] sm:$0xff]
      %v396 = vld [vmem:[%s2 + $0x8] sm:$0xff]
      %v397 = vld [vmem:[%s2 + $0x10] sm:$0xff]
      %v398 = vld [vmem:[%s2 + $0x18] sm:$0xff]
      %v399 = vld [vmem:[%s5] sm:$0x1]
      %v401 = vperm.slane %v399, 0
      %vm403 = vcmask 261120
      %v405 = vsel %vm403, %v363, 0
      %v408 = vsel %vm403, %v364, 0
      %v411 = vsel %vm403, %v365, 0
      %v414 = vsel %vm403, %v366, 0
      %v417 = vsel %vm403, %v367, 0
      %v420 = vsel %vm403, %v368, 0
      %v423 = vsel %vm403, %v369, 0
      %v426 = vsel %vm403, %v370, 0
      %v429 = vsel %vm403, %v371, 0
      %v432 = vsel %vm403, %v372, 0
      %v435 = vsel %vm403, %v373, 0
      %v438 = vsel %vm403, %v374, 0
      %v441 = vsel %vm403, %v375, 0
      %v444 = vsel %vm403, %v376, 0
      %v447 = vsel %vm403, %v377, 0
      %v450 = vsel %vm403, %v378, 0
      %v453 = vsel %vm403, %v379, 0
      %v456 = vsel %vm403, %v380, 0
      %v459 = vsel %vm403, %v381, 0
      %v462 = vsel %vm403, %v382, 0
      %v465 = vsel %vm403, %v383, 0
      %v468 = vsel %vm403, %v384, 0
      %v471 = vsel %vm403, %v385, 0
      %v474 = vsel %vm403, %v386, 0
      %v477 = vsel %vm403, %v387, 0
      %v480 = vsel %vm403, %v388, 0
      %v483 = vsel %vm403, %v389, 0
      %v486 = vsel %vm403, %v390, 0
      %v489 = vsel %vm403, %v391, 0
      %v492 = vsel %vm403, %v392, 0
      %v495 = vsel %vm403, %v393, 0
      %v498 = vsel %vm403, %v394, 0
      %500 = vmatpush.msra.mxu0 0.0
      %501 = vmatpush.msra.mxu0 0.0
      %502 = vmatpush.msra.mxu0 0.0
      %503 = vmatpush.msra.mxu0 0.0
      %504 = vmatpush.msra.mxu0 0.0
      %505 = vmatpush.msra.mxu0 0.0
      %506 = vmatpush.msra.mxu0 0.0
      %507 = vmatpush.msra.mxu0 0.0
      %508 = vmatpush.msra.mxu0 0.0
      %509 = vmatpush.msra.mxu0 0.0
      %510 = vmatpush.msra.mxu0 0.0
      %511 = vmatpush.msra.mxu0 0.0
      %512 = vmatpush.msra.mxu0 %v398
      %513 = vmatpush.msra.mxu0 %v397
      %514 = vmatpush.msra.mxu0 %v396
      %515 = vmatpush.msra.mxu0 %v395
      %516 = vmatmul.f32.gmra.mxu0 %v405
      %v517 = vpop.f32.mrf.mxu0
      %v518 = vadd.f32 %v401, %v517
      %519 = vmatmul.f32.gmra.mxu0 %v408
      %v520 = vpop.f32.mrf.mxu0
      %v521 = vadd.f32 %v401, %v520
      %522 = vmatmul.f32.gmra.mxu0 %v411
      %v523 = vpop.f32.mrf.mxu0
      %v524 = vadd.f32 %v401, %v523
      %525 = vmatmul.f32.gmra.mxu0 %v414
      %v526 = vpop.f32.mrf.mxu0
      %v527 = vadd.f32 %v401, %v526
      %528 = vmatmul.f32.gmra.mxu0 %v417
      %v529 = vpop.f32.mrf.mxu0
      %v530 = vadd.f32 %v401, %v529
      %531 = vmatmul.f32.gmra.mxu0 %v420
      %v532 = vpop.f32.mrf.mxu0
      %v533 = vadd.f32 %v401, %v532
      %534 = vmatmul.f32.gmra.mxu0 %v423
      %v535 = vpop.f32.mrf.mxu0
      %v536 = vadd.f32 %v401, %v535
      %537 = vmatmul.f32.gmra.mxu0 %v426
      %v538 = vpop.f32.mrf.mxu0
      %v539 = vadd.f32 %v401, %v538
      %540 = vmatmul.f32.gmra.mxu0 %v429
      %v541 = vpop.f32.mrf.mxu0
      %v542 = vadd.f32 %v401, %v541
      %543 = vmatmul.f32.gmra.mxu0 %v432
      %v544 = vpop.f32.mrf.mxu0
      %v545 = vadd.f32 %v401, %v544
      %546 = vmatmul.f32.gmra.mxu0 %v435
      %v547 = vpop.f32.mrf.mxu0
      %v548 = vadd.f32 %v401, %v547
      %549 = vmatmul.f32.gmra.mxu0 %v438
      %v550 = vpop.f32.mrf.mxu0
      %v551 = vadd.f32 %v401, %v550
      %552 = vmatmul.f32.gmra.mxu0 %v441
      %v553 = vpop.f32.mrf.mxu0
      %v554 = vadd.f32 %v401, %v553
      %555 = vmatmul.f32.gmra.mxu0 %v444
      %v556 = vpop.f32.mrf.mxu0
      %v557 = vadd.f32 %v401, %v556
      %558 = vmatmul.f32.gmra.mxu0 %v447
      %v559 = vpop.f32.mrf.mxu0
      %v560 = vadd.f32 %v401, %v559
      %561 = vmatmul.f32.gmra.mxu0 %v450
      %v562 = vpop.f32.mrf.mxu0
      %v563 = vadd.f32 %v401, %v562
      %564 = vmatmul.f32.gmra.mxu0 %v453
      %v565 = vpop.f32.mrf.mxu0
      %v566 = vadd.f32 %v401, %v565
      %567 = vmatmul.f32.gmra.mxu0 %v456
      %v568 = vpop.f32.mrf.mxu0
      %v569 = vadd.f32 %v401, %v568
      %570 = vmatmul.f32.gmra.mxu0 %v459
      %v571 = vpop.f32.mrf.mxu0
      %v572 = vadd.f32 %v401, %v571
      %573 = vmatmul.f32.gmra.mxu0 %v462
      %v574 = vpop.f32.mrf.mxu0
      %v575 = vadd.f32 %v401, %v574
      %576 = vmatmul.f32.gmra.mxu0 %v465
      %v577 = vpop.f32.mrf.mxu0
      %v578 = vadd.f32 %v401, %v577
      %579 = vmatmul.f32.gmra.mxu0 %v468
      %v580 = vpop.f32.mrf.mxu0
      %v581 = vadd.f32 %v401, %v580
      %582 = vmatmul.f32.gmra.mxu0 %v471
      %v583 = vpop.f32.mrf.mxu0
      %v584 = vadd.f32 %v401, %v583
      %585 = vmatmul.f32.gmra.mxu0 %v474
      %v586 = vpop.f32.mrf.mxu0
      %v587 = vadd.f32 %v401, %v586
      %588 = vmatmul.f32.gmra.mxu0 %v477
      %v589 = vpop.f32.mrf.mxu0
      %v590 = vadd.f32 %v401, %v589
      %591 = vmatmul.f32.gmra.mxu0 %v480
      %v592 = vpop.f32.mrf.mxu0
      %v593 = vadd.f32 %v401, %v592
      %594 = vmatmul.f32.gmra.mxu0 %v483
      %v595 = vpop.f32.mrf.mxu0
      %v596 = vadd.f32 %v401, %v595
      %597 = vmatmul.f32.gmra.mxu0 %v486
      %v598 = vpop.f32.mrf.mxu0
      %v599 = vadd.f32 %v401, %v598
      %600 = vmatmul.f32.gmra.mxu0 %v489
      %v601 = vpop.f32.mrf.mxu0
      %v602 = vadd.f32 %v401, %v601
      %603 = vmatmul.f32.gmra.mxu0 %v492
      %v604 = vpop.f32.mrf.mxu0
      %v605 = vadd.f32 %v401, %v604
      %606 = vmatmul.f32.gmra.mxu0 %v495
      %v607 = vpop.f32.mrf.mxu0
      %v608 = vadd.f32 %v401, %v607
      %609 = vmatmul.f32.gmra.mxu0 %v498
      %v610 = vpop.f32.mrf.mxu0
      %v611 = vadd.f32 %v401, %v610
      %612 = vdwg.mxu0
      %v613 = vld [vmem:[%s3] sm:$0xf]
      %v614 = vld [vmem:[%s6] sm:$0xf]
      %616 = vset.pattern.permute.xlu0 0
      %617 = vperm.xlu0 %616, %v614
      %v618 = vpop.permute.xlu0 %617
      %v621 = vsel %vm403, %v613, 0
      %623 = vmatpush.msra.mxu0 0.0
      %624 = vmatpush.msra.mxu0 0.0
      %625 = vmatpush.msra.mxu0 0.0
      %626 = vmatpush.msra.mxu0 0.0
      %627 = vmatpush.msra.mxu0 0.0
      %628 = vmatpush.msra.mxu0 0.0
      %629 = vmatpush.msra.mxu0 0.0
      %630 = vmatpush.msra.mxu0 0.0
      %631 = vmatpush.msra.mxu0 0.0
      %632 = vmatpush.msra.mxu0 0.0
      %633 = vmatpush.msra.mxu0 0.0
      %634 = vmatpush.msra.mxu0 0.0
      %635 = vmatpush.msra.mxu0 %v361
      %636 = vmatpush.msra.mxu0 %v359
      %637 = vmatpush.msra.mxu0 %v357
      %638 = vmatpush.msra.mxu0 %v355
      %639 = vmatmul.f32.gmra.mxu0 %v621
      %v640 = vpop.f32.mrf.mxu0
      %v641 = vadd.f32 %v618, %v640
      %642 = vdwg.mxu0
      %643 = vmatpush.msra.mxu0 0.0
      %644 = vmatpush.msra.mxu0 0.0
      %645 = vmatpush.msra.mxu0 0.0
      %646 = vmatpush.msra.mxu0 0.0
      %647 = vmatpush.msra.mxu0 0.0
      %648 = vmatpush.msra.mxu0 0.0
      %649 = vmatpush.msra.mxu0 0.0
      %650 = vmatpush.msra.mxu0 0.0
      %651 = vmatpush.msra.mxu0 0.0
      %652 = vmatpush.msra.mxu0 0.0
      %653 = vmatpush.msra.mxu0 0.0
      %654 = vmatpush.msra.mxu0 0.0
      %655 = vmatpush.msra.mxu0 %v362
      %656 = vmatpush.msra.mxu0 %v360
      %657 = vmatpush.msra.mxu0 %v358
      %658 = vmatpush.msra.mxu0 %v356
      %659 = vmatmul.f32.gmra.mxu0 %v621
      %v660 = vpop.f32.mrf.mxu0
      %v661 = vadd.f32 %v618, %v660
      %662 = vdwg.mxu0
      %v663 = vld [vmem:[%s4] sm:$0xff]
      %v664 = vld [vmem:[%s4 + $0x8] sm:$0xff]
      %v665 = vld [vmem:[%s4 + $0x10] sm:$0xff]
      %v666 = vld [vmem:[%s4 + $0x18] sm:$0xff]
      %v667 = vld [vmem:[%s7] sm:$0xff]
      %v668 = vld [vmem:[%s7 + $0x8] sm:$0xff]
      %v669 = vld [vmem:[%s7 + $0x10] sm:$0xff]
      %v670 = vld [vmem:[%s7 + $0x18] sm:$0xff]
      %672 = vset.pattern.permute.xlu0 0
      %673 = vperm.xlu0 %672, %v667
      %v674 = vpop.permute.xlu0 %673
      %677 = vset.pattern.permute.xlu0 0
      %678 = vperm.xlu0 %677, %v668
      %v679 = vpop.permute.xlu0 %678
      %682 = vset.pattern.permute.xlu0 0
      %683 = vperm.xlu0 %682, %v669
      %v684 = vpop.permute.xlu0 %683
      %687 = vset.pattern.permute.xlu0 0
      %688 = vperm.xlu0 %687, %v670
      %v689 = vpop.permute.xlu0 %688
      %v692 = vsel %vm403, %v663, 0
      %v695 = vsel %vm403, %v664, 0
      %v698 = vsel %vm403, %v665, 0
      %v701 = vsel %vm403, %v666, 0
      %703 = vmatpush.msra.mxu0 0.0
      %704 = vmatpush.msra.mxu0 0.0
      %705 = vmatpush.msra.mxu0 0.0
      %706 = vmatpush.msra.mxu0 0.0
      %707 = vmatpush.msra.mxu0 0.0
      %708 = vmatpush.msra.mxu0 0.0
      %709 = vmatpush.msra.mxu0 0.0
      %710 = vmatpush.msra.mxu0 0.0
      %711 = vmatpush.msra.mxu0 0.0
      %712 = vmatpush.msra.mxu0 0.0
      %713 = vmatpush.msra.mxu0 0.0
      %714 = vmatpush.msra.mxu0 0.0
      %715 = vmatpush.msra.mxu0 %v361
      %716 = vmatpush.msra.mxu0 %v359
      %717 = vmatpush.msra.mxu0 %v357
      %718 = vmatpush.msra.mxu0 %v355
      %719 = vmatmul.f32.gmra.mxu0 %v692
      %v720 = vpop.f32.mrf.mxu0
      %v721 = vadd.f32 %v674, %v720
      %722 = vmatmul.f32.gmra.mxu0 %v695
      %v723 = vpop.f32.mrf.mxu0
      %v724 = vadd.f32 %v679, %v723
      %725 = vmatmul.f32.gmra.mxu0 %v698
      %v726 = vpop.f32.mrf.mxu0
      %v727 = vadd.f32 %v684, %v726
      %728 = vmatmul.f32.gmra.mxu0 %v701
      %v729 = vpop.f32.mrf.mxu0
      %v730 = vadd.f32 %v689, %v729
      %731 = vdwg.mxu0
      %732 = vmatpush.msra.mxu0 0.0
      %733 = vmatpush.msra.mxu0 0.0
      %734 = vmatpush.msra.mxu0 0.0
      %735 = vmatpush.msra.mxu0 0.0
      %736 = vmatpush.msra.mxu0 0.0
      %737 = vmatpush.msra.mxu0 0.0
      %738 = vmatpush.msra.mxu0 0.0
      %739 = vmatpush.msra.mxu0 0.0
      %740 = vmatpush.msra.mxu0 0.0
      %741 = vmatpush.msra.mxu0 0.0
      %742 = vmatpush.msra.mxu0 0.0
      %743 = vmatpush.msra.mxu0 0.0
      %744 = vmatpush.msra.mxu0 %v362
      %745 = vmatpush.msra.mxu0 %v360
      %746 = vmatpush.msra.mxu0 %v358
      %747 = vmatpush.msra.mxu0 %v356
      %748 = vmatmul.f32.gmra.mxu0 %v692
      %v749 = vpop.f32.mrf.mxu0
      %v750 = vadd.f32 %v674, %v749
      %751 = vmatmul.f32.gmra.mxu0 %v695
      %v752 = vpop.f32.mrf.mxu0
      %v753 = vadd.f32 %v679, %v752
      %754 = vmatmul.f32.gmra.mxu0 %v698
      %v755 = vpop.f32.mrf.mxu0
      %v756 = vadd.f32 %v684, %v755
      %757 = vmatmul.f32.gmra.mxu0 %v701
      %v758 = vpop.f32.mrf.mxu0
      %v759 = vadd.f32 %v689, %v758
      %760 = vdwg.mxu0
      %vm761 = vcmask 31744
      %v763 = vsel %vm761, %v518, 0
      %v766 = vsel %vm761, %v521, 0
      %v769 = vsel %vm761, %v524, 0
      %v772 = vsel %vm761, %v527, 0
      %v775 = vsel %vm761, %v530, 0
      %v778 = vsel %vm761, %v533, 0
      %v781 = vsel %vm761, %v536, 0
      %v784 = vsel %vm761, %v539, 0
      %v787 = vsel %vm761, %v542, 0
      %v790 = vsel %vm761, %v545, 0
      %v793 = vsel %vm761, %v548, 0
      %v796 = vsel %vm761, %v551, 0
      %v799 = vsel %vm761, %v554, 0
      %v802 = vsel %vm761, %v557, 0
      %v805 = vsel %vm761, %v560, 0
      %v808 = vsel %vm761, %v563, 0
      %v811 = vsel %vm761, %v566, 0
      %v814 = vsel %vm761, %v569, 0
      %v817 = vsel %vm761, %v572, 0
      %v820 = vsel %vm761, %v575, 0
      %v823 = vsel %vm761, %v578, 0
      %v826 = vsel %vm761, %v581, 0
      %v829 = vsel %vm761, %v584, 0
      %v832 = vsel %vm761, %v587, 0
      %v835 = vsel %vm761, %v590, 0
      %v838 = vsel %vm761, %v593, 0
      %v841 = vsel %vm761, %v596, 0
      %v844 = vsel %vm761, %v599, 0
      %v847 = vsel %vm761, %v602, 0
      %v850 = vsel %vm761, %v605, 0
      %v853 = vsel %vm761, %v608, 0
      %v856 = vsel %vm761, %v611, 0
      %vm858 = vcmask 1043456
      %v860 = vsel %vm858, %v641, 0
      %v863 = vsel %vm858, %v661, 0
      %865 = vmatpush.msra.mxu0 0.0
      %866 = vmatpush.msra.mxu0 0.0
      %867 = vmatpush.msra.mxu0 0.0
      %868 = vmatpush.msra.mxu0 0.0
      %869 = vmatpush.msra.mxu0 0.0
      %870 = vmatpush.msra.mxu0 0.0
      %871 = vmatpush.msra.mxu0 0.0
      %872 = vmatpush.msra.mxu0 0.0
      %873 = vmatpush.msra.mxu0 0.0
      %874 = vmatpush.msra.mxu0 0.0
      %875 = vmatpush.msra.mxu0 0.0
      %876 = vmatpush.msra.mxu0 0.0
      %877 = vmatpush.msra.mxu0 0.0
      %878 = vmatpush.msra.mxu0 0.0
      %879 = vmatpush.msra.mxu0 0.0
      %880 = vmatpush.msra.mxu0 %v860
      %881 = vmatmul.f32.gmra.mxu0 %v763
      %v882 = vpop.f32.mrf.mxu0
      %v883 = vadd.f32 0.0, %v882
      %884 = vmatmul.f32.gmra.mxu0 %v766
      %v885 = vpop.f32.mrf.mxu0
      %v886 = vadd.f32 0.0, %v885
      %887 = vmatmul.f32.gmra.mxu0 %v769
      %v888 = vpop.f32.mrf.mxu0
      %v889 = vadd.f32 0.0, %v888
      %890 = vmatmul.f32.gmra.mxu0 %v772
      %v891 = vpop.f32.mrf.mxu0
      %v892 = vadd.f32 0.0, %v891
      %893 = vmatmul.f32.gmra.mxu0 %v775
      %v894 = vpop.f32.mrf.mxu0
      %v895 = vadd.f32 0.0, %v894
      %896 = vmatmul.f32.gmra.mxu0 %v778
      %v897 = vpop.f32.mrf.mxu0
      %v898 = vadd.f32 0.0, %v897
      %899 = vmatmul.f32.gmra.mxu0 %v781
      %v900 = vpop.f32.mrf.mxu0
      %v901 = vadd.f32 0.0, %v900
      %902 = vmatmul.f32.gmra.mxu0 %v784
      %v903 = vpop.f32.mrf.mxu0
      %v904 = vadd.f32 0.0, %v903
      %905 = vmatmul.f32.gmra.mxu0 %v787
      %v906 = vpop.f32.mrf.mxu0
      %v907 = vadd.f32 0.0, %v906
      %908 = vmatmul.f32.gmra.mxu0 %v790
      %v909 = vpop.f32.mrf.mxu0
      %v910 = vadd.f32 0.0, %v909
      %911 = vmatmul.f32.gmra.mxu0 %v793
      %v912 = vpop.f32.mrf.mxu0
      %v913 = vadd.f32 0.0, %v912
      %914 = vmatmul.f32.gmra.mxu0 %v796
      %v915 = vpop.f32.mrf.mxu0
      %v916 = vadd.f32 0.0, %v915
      %917 = vmatmul.f32.gmra.mxu0 %v799
      %v918 = vpop.f32.mrf.mxu0
      %v919 = vadd.f32 0.0, %v918
      %920 = vmatmul.f32.gmra.mxu0 %v802
      %v921 = vpop.f32.mrf.mxu0
      %v922 = vadd.f32 0.0, %v921
      %923 = vmatmul.f32.gmra.mxu0 %v805
      %v924 = vpop.f32.mrf.mxu0
      %v925 = vadd.f32 0.0, %v924
      %926 = vmatmul.f32.gmra.mxu0 %v808
      %v927 = vpop.f32.mrf.mxu0
      %v928 = vadd.f32 0.0, %v927
      %929 = vmatmul.f32.gmra.mxu0 %v811
      %v930 = vpop.f32.mrf.mxu0
      %v931 = vadd.f32 0.0, %v930
      %932 = vmatmul.f32.gmra.mxu0 %v814
      %v933 = vpop.f32.mrf.mxu0
      %v934 = vadd.f32 0.0, %v933
      %935 = vmatmul.f32.gmra.mxu0 %v817
      %v936 = vpop.f32.mrf.mxu0
      %v937 = vadd.f32 0.0, %v936
      %938 = vmatmul.f32.gmra.mxu0 %v820
      %v939 = vpop.f32.mrf.mxu0
      %v940 = vadd.f32 0.0, %v939
      %941 = vmatmul.f32.gmra.mxu0 %v823
      %v942 = vpop.f32.mrf.mxu0
      %v943 = vadd.f32 0.0, %v942
      %944 = vmatmul.f32.gmra.mxu0 %v826
      %v945 = vpop.f32.mrf.mxu0
      %v946 = vadd.f32 0.0, %v945
      %947 = vmatmul.f32.gmra.mxu0 %v829
      %v948 = vpop.f32.mrf.mxu0
      %v949 = vadd.f32 0.0, %v948
      %950 = vmatmul.f32.gmra.mxu0 %v832
      %v951 = vpop.f32.mrf.mxu0
      %v952 = vadd.f32 0.0, %v951
      %953 = vmatmul.f32.gmra.mxu0 %v835
      %v954 = vpop.f32.mrf.mxu0
      %v955 = vadd.f32 0.0, %v954
      %956 = vmatmul.f32.gmra.mxu0 %v838
      %v957 = vpop.f32.mrf.mxu0
      %v958 = vadd.f32 0.0, %v957
      %959 = vmatmul.f32.gmra.mxu0 %v841
      %v960 = vpop.f32.mrf.mxu0
      %v961 = vadd.f32 0.0, %v960
      %962 = vmatmul.f32.gmra.mxu0 %v844
      %v963 = vpop.f32.mrf.mxu0
      %v964 = vadd.f32 0.0, %v963
      %965 = vmatmul.f32.gmra.mxu0 %v847
      %v966 = vpop.f32.mrf.mxu0
      %v967 = vadd.f32 0.0, %v966
      %968 = vmatmul.f32.gmra.mxu0 %v850
      %v969 = vpop.f32.mrf.mxu0
      %v970 = vadd.f32 0.0, %v969
      %971 = vmatmul.f32.gmra.mxu0 %v853
      %v972 = vpop.f32.mrf.mxu0
      %v973 = vadd.f32 0.0, %v972
      %974 = vmatmul.f32.gmra.mxu0 %v856
      %v975 = vpop.f32.mrf.mxu0
      %v976 = vadd.f32 0.0, %v975
      %977 = vdwg.mxu0
      %978 = vmatpush.msra.mxu0 0.0
      %979 = vmatpush.msra.mxu0 0.0
      %980 = vmatpush.msra.mxu0 0.0
      %981 = vmatpush.msra.mxu0 0.0
      %982 = vmatpush.msra.mxu0 0.0
      %983 = vmatpush.msra.mxu0 0.0
      %984 = vmatpush.msra.mxu0 0.0
      %985 = vmatpush.msra.mxu0 0.0
      %986 = vmatpush.msra.mxu0 0.0
      %987 = vmatpush.msra.mxu0 0.0
      %988 = vmatpush.msra.mxu0 0.0
      %989 = vmatpush.msra.mxu0 0.0
      %990 = vmatpush.msra.mxu0 0.0
      %991 = vmatpush.msra.mxu0 0.0
      %992 = vmatpush.msra.mxu0 0.0
      %993 = vmatpush.msra.mxu0 %v863
      %994 = vmatmul.f32.gmra.mxu0 %v763
      %v995 = vpop.f32.mrf.mxu0
      %v996 = vadd.f32 0.0, %v995
      %997 = vmatmul.f32.gmra.mxu0 %v766
      %v998 = vpop.f32.mrf.mxu0
      %v999 = vadd.f32 0.0, %v998
      %1000 = vmatmul.f32.gmra.mxu0 %v769
      %v1001 = vpop.f32.mrf.mxu0
      %v1002 = vadd.f32 0.0, %v1001
      %1003 = vmatmul.f32.gmra.mxu0 %v772
      %v1004 = vpop.f32.mrf.mxu0
      %v1005 = vadd.f32 0.0, %v1004
      %1006 = vmatmul.f32.gmra.mxu0 %v775
      %v1007 = vpop.f32.mrf.mxu0
      %v1008 = vadd.f32 0.0, %v1007
      %1009 = vmatmul.f32.gmra.mxu0 %v778
      %v1010 = vpop.f32.mrf.mxu0
      %v1011 = vadd.f32 0.0, %v1010
      %1012 = vmatmul.f32.gmra.mxu0 %v781
      %v1013 = vpop.f32.mrf.mxu0
      %v1014 = vadd.f32 0.0, %v1013
      %1015 = vmatmul.f32.gmra.mxu0 %v784
      %v1016 = vpop.f32.mrf.mxu0
      %v1017 = vadd.f32 0.0, %v1016
      %1018 = vmatmul.f32.gmra.mxu0 %v787
      %v1019 = vpop.f32.mrf.mxu0
      %v1020 = vadd.f32 0.0, %v1019
      %1021 = vmatmul.f32.gmra.mxu0 %v790
      %v1022 = vpop.f32.mrf.mxu0
      %v1023 = vadd.f32 0.0, %v1022
      %1024 = vmatmul.f32.gmra.mxu0 %v793
      %v1025 = vpop.f32.mrf.mxu0
      %v1026 = vadd.f32 0.0, %v1025
      %1027 = vmatmul.f32.gmra.mxu0 %v796
      %v1028 = vpop.f32.mrf.mxu0
      %v1029 = vadd.f32 0.0, %v1028
      %1030 = vmatmul.f32.gmra.mxu0 %v799
      %v1031 = vpop.f32.mrf.mxu0
      %v1032 = vadd.f32 0.0, %v1031
      %1033 = vmatmul.f32.gmra.mxu0 %v802
      %v1034 = vpop.f32.mrf.mxu0
      %v1035 = vadd.f32 0.0, %v1034
      %1036 = vmatmul.f32.gmra.mxu0 %v805
      %v1037 = vpop.f32.mrf.mxu0
      %v1038 = vadd.f32 0.0, %v1037
      %1039 = vmatmul.f32.gmra.mxu0 %v808
      %v1040 = vpop.f32.mrf.mxu0
      %v1041 = vadd.f32 0.0, %v1040
      %1042 = vmatmul.f32.gmra.mxu0 %v811
      %v1043 = vpop.f32.mrf.mxu0
      %v1044 = vadd.f32 0.0, %v1043
      %1045 = vmatmul.f32.gmra.mxu0 %v814
      %v1046 = vpop.f32.mrf.mxu0
      %v1047 = vadd.f32 0.0, %v1046
      %1048 = vmatmul.f32.gmra.mxu0 %v817
      %v1049 = vpop.f32.mrf.mxu0
      %v1050 = vadd.f32 0.0, %v1049
      %1051 = vmatmul.f32.gmra.mxu0 %v820
      %v1052 = vpop.f32.mrf.mxu0
      %v1053 = vadd.f32 0.0, %v1052
      %1054 = vmatmul.f32.gmra.mxu0 %v823
      %v1055 = vpop.f32.mrf.mxu0
      %v1056 = vadd.f32 0.0, %v1055
      %1057 = vmatmul.f32.gmra.mxu0 %v826
      %v1058 = vpop.f32.mrf.mxu0
      %v1059 = vadd.f32 0.0, %v1058
      %1060 = vmatmul.f32.gmra.mxu0 %v829
      %v1061 = vpop.f32.mrf.mxu0
      %v1062 = vadd.f32 0.0, %v1061
      %1063 = vmatmul.f32.gmra.mxu0 %v832
      %v1064 = vpop.f32.mrf.mxu0
      %v1065 = vadd.f32 0.0, %v1064
      %1066 = vmatmul.f32.gmra.mxu0 %v835
      %v1067 = vpop.f32.mrf.mxu0
      %v1068 = vadd.f32 0.0, %v1067
      %1069 = vmatmul.f32.gmra.mxu0 %v838
      %v1070 = vpop.f32.mrf.mxu0
      %v1071 = vadd.f32 0.0, %v1070
      %1072 = vmatmul.f32.gmra.mxu0 %v841
      %v1073 = vpop.f32.mrf.mxu0
      %v1074 = vadd.f32 0.0, %v1073
      %1075 = vmatmul.f32.gmra.mxu0 %v844
      %v1076 = vpop.f32.mrf.mxu0
      %v1077 = vadd.f32 0.0, %v1076
      %1078 = vmatmul.f32.gmra.mxu0 %v847
      %v1079 = vpop.f32.mrf.mxu0
      %v1080 = vadd.f32 0.0, %v1079
      %1081 = vmatmul.f32.gmra.mxu0 %v850
      %v1082 = vpop.f32.mrf.mxu0
      %v1083 = vadd.f32 0.0, %v1082
      %1084 = vmatmul.f32.gmra.mxu0 %v853
      %v1085 = vpop.f32.mrf.mxu0
      %v1086 = vadd.f32 0.0, %v1085
      %1087 = vmatmul.f32.gmra.mxu0 %v856
      %v1088 = vpop.f32.mrf.mxu0
      %v1089 = vadd.f32 0.0, %v1088
      %1090 = vdwg.mxu0
      %v1091 = vmax.f32 %v883, %v996
      %1092 = vmax.xlane.f32.xlu0 %v1091
      %v1093 = vpop.xlane.xlu0 %1092
      %v1094 = vmax.f32 %v886, %v999
      %1095 = vmax.xlane.f32.xlu0 %v1094
      %v1096 = vpop.xlane.xlu0 %1095
      %v1097 = vmax.f32 %v889, %v1002
      %1098 = vmax.xlane.f32.xlu0 %v1097
      %v1099 = vpop.xlane.xlu0 %1098
      %v1100 = vmax.f32 %v892, %v1005
      %1101 = vmax.xlane.f32.xlu0 %v1100
      %v1102 = vpop.xlane.xlu0 %1101
      %v1103 = vmax.f32 %v895, %v1008
      %1104 = vmax.xlane.f32.xlu0 %v1103
      %v1105 = vpop.xlane.xlu0 %1104
      %v1106 = vmax.f32 %v898, %v1011
      %1107 = vmax.xlane.f32.xlu0 %v1106
      %v1108 = vpop.xlane.xlu0 %1107
      %v1109 = vmax.f32 %v901, %v1014
      %1110 = vmax.xlane.f32.xlu0 %v1109
      %v1111 = vpop.xlane.xlu0 %1110
      %v1112 = vmax.f32 %v904, %v1017
      %1113 = vmax.xlane.f32.xlu0 %v1112
      %v1114 = vpop.xlane.xlu0 %1113
      %v1115 = vmax.f32 %v907, %v1020
      %1116 = vmax.xlane.f32.xlu0 %v1115
      %v1117 = vpop.xlane.xlu0 %1116
      %v1118 = vmax.f32 %v910, %v1023
      %1119 = vmax.xlane.f32.xlu0 %v1118
      %v1120 = vpop.xlane.xlu0 %1119
      %v1121 = vmax.f32 %v913, %v1026
      %1122 = vmax.xlane.f32.xlu0 %v1121
      %v1123 = vpop.xlane.xlu0 %1122
      %v1124 = vmax.f32 %v916, %v1029
      %1125 = vmax.xlane.f32.xlu0 %v1124
      %v1126 = vpop.xlane.xlu0 %1125
      %v1127 = vmax.f32 %v919, %v1032
      %1128 = vmax.xlane.f32.xlu0 %v1127
      %v1129 = vpop.xlane.xlu0 %1128
      %v1130 = vmax.f32 %v922, %v1035
      %1131 = vmax.xlane.f32.xlu0 %v1130
      %v1132 = vpop.xlane.xlu0 %1131
      %v1133 = vmax.f32 %v925, %v1038
      %1134 = vmax.xlane.f32.xlu0 %v1133
      %v1135 = vpop.xlane.xlu0 %1134
      %v1136 = vmax.f32 %v928, %v1041
      %1137 = vmax.xlane.f32.xlu0 %v1136
      %v1138 = vpop.xlane.xlu0 %1137
      %v1139 = vmax.f32 %v931, %v1044
      %1140 = vmax.xlane.f32.xlu0 %v1139
      %v1141 = vpop.xlane.xlu0 %1140
      %v1142 = vmax.f32 %v934, %v1047
      %1143 = vmax.xlane.f32.xlu0 %v1142
      %v1144 = vpop.xlane.xlu0 %1143
      %v1145 = vmax.f32 %v937, %v1050
      %1146 = vmax.xlane.f32.xlu0 %v1145
      %v1147 = vpop.xlane.xlu0 %1146
      %v1148 = vmax.f32 %v940, %v1053
      %1149 = vmax.xlane.f32.xlu0 %v1148
      %v1150 = vpop.xlane.xlu0 %1149
      %v1151 = vmax.f32 %v943, %v1056
      %1152 = vmax.xlane.f32.xlu0 %v1151
      %v1153 = vpop.xlane.xlu0 %1152
      %v1154 = vmax.f32 %v946, %v1059
      %1155 = vmax.xlane.f32.xlu0 %v1154
      %v1156 = vpop.xlane.xlu0 %1155
      %v1157 = vmax.f32 %v949, %v1062
      %1158 = vmax.xlane.f32.xlu0 %v1157
      %v1159 = vpop.xlane.xlu0 %1158
      %v1160 = vmax.f32 %v952, %v1065
      %1161 = vmax.xlane.f32.xlu0 %v1160
      %v1162 = vpop.xlane.xlu0 %1161
      %v1163 = vmax.f32 %v955, %v1068
      %1164 = vmax.xlane.f32.xlu0 %v1163
      %v1165 = vpop.xlane.xlu0 %1164
      %v1166 = vmax.f32 %v958, %v1071
      %1167 = vmax.xlane.f32.xlu0 %v1166
      %v1168 = vpop.xlane.xlu0 %1167
      %v1169 = vmax.f32 %v961, %v1074
      %1170 = vmax.xlane.f32.xlu0 %v1169
      %v1171 = vpop.xlane.xlu0 %1170
      %v1172 = vmax.f32 %v964, %v1077
      %1173 = vmax.xlane.f32.xlu0 %v1172
      %v1174 = vpop.xlane.xlu0 %1173
      %v1175 = vmax.f32 %v967, %v1080
      %1176 = vmax.xlane.f32.xlu0 %v1175
      %v1177 = vpop.xlane.xlu0 %1176
      %v1178 = vmax.f32 %v970, %v1083
      %1179 = vmax.xlane.f32.xlu0 %v1178
      %v1180 = vpop.xlane.xlu0 %1179
      %v1181 = vmax.f32 %v973, %v1086
      %1182 = vmax.xlane.f32.xlu0 %v1181
      %v1183 = vpop.xlane.xlu0 %1182
      %v1184 = vmax.f32 %v976, %v1089
      %1185 = vmax.xlane.f32.xlu0 %v1184
      %v1186 = vpop.xlane.xlu0 %1185
      %v1187 = vsub.f32 %v883, %v1093
      %v1188 = vsub.f32 %v996, %v1093
      %v1189 = vsub.f32 %v886, %v1096
      %v1190 = vsub.f32 %v999, %v1096
      %v1191 = vsub.f32 %v889, %v1099
      %v1192 = vsub.f32 %v1002, %v1099
      %v1193 = vsub.f32 %v892, %v1102
      %v1194 = vsub.f32 %v1005, %v1102
      %v1195 = vsub.f32 %v895, %v1105
      %v1196 = vsub.f32 %v1008, %v1105
      %v1197 = vsub.f32 %v898, %v1108
      %v1198 = vsub.f32 %v1011, %v1108
      %v1199 = vsub.f32 %v901, %v1111
      %v1200 = vsub.f32 %v1014, %v1111
      %v1201 = vsub.f32 %v904, %v1114
      %v1202 = vsub.f32 %v1017, %v1114
      %v1203 = vsub.f32 %v907, %v1117
      %v1204 = vsub.f32 %v1020, %v1117
      %v1205 = vsub.f32 %v910, %v1120
      %v1206 = vsub.f32 %v1023, %v1120
      %v1207 = vsub.f32 %v913, %v1123
      %v1208 = vsub.f32 %v1026, %v1123
      %v1209 = vsub.f32 %v916, %v1126
      %v1210 = vsub.f32 %v1029, %v1126
      %v1211 = vsub.f32 %v919, %v1129
      %v1212 = vsub.f32 %v1032, %v1129
      %v1213 = vsub.f32 %v922, %v1132
      %v1214 = vsub.f32 %v1035, %v1132
      %v1215 = vsub.f32 %v925, %v1135
      %v1216 = vsub.f32 %v1038, %v1135
      %v1217 = vsub.f32 %v928, %v1138
      %v1218 = vsub.f32 %v1041, %v1138
      %v1219 = vsub.f32 %v931, %v1141
      %v1220 = vsub.f32 %v1044, %v1141
      %v1221 = vsub.f32 %v934, %v1144
      %v1222 = vsub.f32 %v1047, %v1144
      %v1223 = vsub.f32 %v937, %v1147
      %v1224 = vsub.f32 %v1050, %v1147
      %v1225 = vsub.f32 %v940, %v1150
      %v1226 = vsub.f32 %v1053, %v1150
      %v1227 = vsub.f32 %v943, %v1153
      %v1228 = vsub.f32 %v1056, %v1153
      %v1229 = vsub.f32 %v946, %v1156
      %v1230 = vsub.f32 %v1059, %v1156
      %v1231 = vsub.f32 %v949, %v1159
      %v1232 = vsub.f32 %v1062, %v1159
      %v1233 = vsub.f32 %v952, %v1162
      %v1234 = vsub.f32 %v1065, %v1162
      %v1235 = vsub.f32 %v955, %v1165
      %v1236 = vsub.f32 %v1068, %v1165
      %v1237 = vsub.f32 %v958, %v1168
      %v1238 = vsub.f32 %v1071, %v1168
      %v1239 = vsub.f32 %v961, %v1171
      %v1240 = vsub.f32 %v1074, %v1171
      %v1241 = vsub.f32 %v964, %v1174
      %v1242 = vsub.f32 %v1077, %v1174
      %v1243 = vsub.f32 %v967, %v1177
      %v1244 = vsub.f32 %v1080, %v1177
      %v1245 = vsub.f32 %v970, %v1180
      %v1246 = vsub.f32 %v1083, %v1180
      %v1247 = vsub.f32 %v973, %v1183
      %v1248 = vsub.f32 %v1086, %v1183
      %v1249 = vsub.f32 %v976, %v1186
      %v1250 = vsub.f32 %v1089, %v1186
      %v1251 = vmul.f32 %v1187, 1.442695
      %v1252 = vpow.pop %v1251
      %v1253 = vmul.f32 %v1188, 1.442695
      %v1254 = vpow.pop %v1253
      %v1255 = vmul.f32 %v1189, 1.442695
      %v1256 = vpow.pop %v1255
      %v1257 = vmul.f32 %v1190, 1.442695
      %v1258 = vpow.pop %v1257
      %v1259 = vmul.f32 %v1191, 1.442695
      %v1260 = vpow.pop %v1259
      %v1261 = vmul.f32 %v1192, 1.442695
      %v1262 = vpow.pop %v1261
      %v1263 = vmul.f32 %v1193, 1.442695
      %v1264 = vpow.pop %v1263
      %v1265 = vmul.f32 %v1194, 1.442695
      %v1266 = vpow.pop %v1265
      %v1267 = vmul.f32 %v1195, 1.442695
      %v1268 = vpow.pop %v1267
      %v1269 = vmul.f32 %v1196, 1.442695
      %v1270 = vpow.pop %v1269
      %v1271 = vmul.f32 %v1197, 1.442695
      %v1272 = vpow.pop %v1271
      %v1273 = vmul.f32 %v1198, 1.442695
      %v1274 = vpow.pop %v1273
      %v1275 = vmul.f32 %v1199, 1.442695
      %v1276 = vpow.pop %v1275
      %v1277 = vmul.f32 %v1200, 1.442695
      %v1278 = vpow.pop %v1277
      %v1279 = vmul.f32 %v1201, 1.442695
      %v1280 = vpow.pop %v1279
      %v1281 = vmul.f32 %v1202, 1.442695
      %v1282 = vpow.pop %v1281
      %v1283 = vmul.f32 %v1203, 1.442695
      %v1284 = vpow.pop %v1283
      %v1285 = vmul.f32 %v1204, 1.442695
      %v1286 = vpow.pop %v1285
      %v1287 = vmul.f32 %v1205, 1.442695
      %v1288 = vpow.pop %v1287
      %v1289 = vmul.f32 %v1206, 1.442695
      %v1290 = vpow.pop %v1289
      %v1291 = vmul.f32 %v1207, 1.442695
      %v1292 = vpow.pop %v1291
      %v1293 = vmul.f32 %v1208, 1.442695
      %v1294 = vpow.pop %v1293
      %v1295 = vmul.f32 %v1209, 1.442695
      %v1296 = vpow.pop %v1295
      %v1297 = vmul.f32 %v1210, 1.442695
      %v1298 = vpow.pop %v1297
      %v1299 = vmul.f32 %v1211, 1.442695
      %v1300 = vpow.pop %v1299
      %v1301 = vmul.f32 %v1212, 1.442695
      %v1302 = vpow.pop %v1301
      %v1303 = vmul.f32 %v1213, 1.442695
      %v1304 = vpow.pop %v1303
      %v1305 = vmul.f32 %v1214, 1.442695
      %v1306 = vpow.pop %v1305
      %v1307 = vmul.f32 %v1215, 1.442695
      %v1308 = vpow.pop %v1307
      %v1309 = vmul.f32 %v1216, 1.442695
      %v1310 = vpow.pop %v1309
      %v1311 = vmul.f32 %v1217, 1.442695
      %v1312 = vpow.pop %v1311
      %v1313 = vmul.f32 %v1218, 1.442695
      %v1314 = vpow.pop %v1313
      %v1315 = vmul.f32 %v1219, 1.442695
      %v1316 = vpow.pop %v1315
      %v1317 = vmul.f32 %v1220, 1.442695
      %v1318 = vpow.pop %v1317
      %v1319 = vmul.f32 %v1221, 1.442695
      %v1320 = vpow.pop %v1319
      %v1321 = vmul.f32 %v1222, 1.442695
      %v1322 = vpow.pop %v1321
      %v1323 = vmul.f32 %v1223, 1.442695
      %v1324 = vpow.pop %v1323
      %v1325 = vmul.f32 %v1224, 1.442695
      %v1326 = vpow.pop %v1325
      %v1327 = vmul.f32 %v1225, 1.442695
      %v1328 = vpow.pop %v1327
      %v1329 = vmul.f32 %v1226, 1.442695
      %v1330 = vpow.pop %v1329
      %v1331 = vmul.f32 %v1227, 1.442695
      %v1332 = vpow.pop %v1331
      %v1333 = vmul.f32 %v1228, 1.442695
      %v1334 = vpow.pop %v1333
      %v1335 = vmul.f32 %v1229, 1.442695
      %v1336 = vpow.pop %v1335
      %v1337 = vmul.f32 %v1230, 1.442695
      %v1338 = vpow.pop %v1337
      %v1339 = vmul.f32 %v1231, 1.442695
      %v1340 = vpow.pop %v1339
      %v1341 = vmul.f32 %v1232, 1.442695
      %v1342 = vpow.pop %v1341
      %v1343 = vmul.f32 %v1233, 1.442695
      %v1344 = vpow.pop %v1343
      %v1345 = vmul.f32 %v1234, 1.442695
      %v1346 = vpow.pop %v1345
      %v1347 = vmul.f32 %v1235, 1.442695
      %v1348 = vpow.pop %v1347
      %v1349 = vmul.f32 %v1236, 1.442695
      %v1350 = vpow.pop %v1349
      %v1351 = vmul.f32 %v1237, 1.442695
      %v1352 = vpow.pop %v1351
      %v1353 = vmul.f32 %v1238, 1.442695
      %v1354 = vpow.pop %v1353
      %v1355 = vmul.f32 %v1239, 1.442695
      %v1356 = vpow.pop %v1355
      %v1357 = vmul.f32 %v1240, 1.442695
      %v1358 = vpow.pop %v1357
      %v1359 = vmul.f32 %v1241, 1.442695
      %v1360 = vpow.pop %v1359
      %v1361 = vmul.f32 %v1242, 1.442695
      %v1362 = vpow.pop %v1361
      %v1363 = vmul.f32 %v1243, 1.442695
      %v1364 = vpow.pop %v1363
      %v1365 = vmul.f32 %v1244, 1.442695
      %v1366 = vpow.pop %v1365
      %v1367 = vmul.f32 %v1245, 1.442695
      %v1368 = vpow.pop %v1367
      %v1369 = vmul.f32 %v1246, 1.442695
      %v1370 = vpow.pop %v1369
      %v1371 = vmul.f32 %v1247, 1.442695
      %v1372 = vpow.pop %v1371
      %v1373 = vmul.f32 %v1248, 1.442695
      %v1374 = vpow.pop %v1373
      %v1375 = vmul.f32 %v1249, 1.442695
      %v1376 = vpow.pop %v1375
      %v1377 = vmul.f32 %v1250, 1.442695
      %v1378 = vpow.pop %v1377
      %v1379 = vadd.f32 %v1252, %v1254
      %1380 = vadd.xlane.f32.xlu0 %v1379
      %v1381 = vpop.xlane.xlu0 %1380
      %v1382 = vadd.f32 %v1256, %v1258
      %1383 = vadd.xlane.f32.xlu0 %v1382
      %v1384 = vpop.xlane.xlu0 %1383
      %v1385 = vadd.f32 %v1260, %v1262
      %1386 = vadd.xlane.f32.xlu0 %v1385
      %v1387 = vpop.xlane.xlu0 %1386
      %v1388 = vadd.f32 %v1264, %v1266
      %1389 = vadd.xlane.f32.xlu0 %v1388
      %v1390 = vpop.xlane.xlu0 %1389
      %v1391 = vadd.f32 %v1268, %v1270
      %1392 = vadd.xlane.f32.xlu0 %v1391
      %v1393 = vpop.xlane.xlu0 %1392
      %v1394 = vadd.f32 %v1272, %v1274
      %1395 = vadd.xlane.f32.xlu0 %v1394
      %v1396 = vpop.xlane.xlu0 %1395
      %v1397 = vadd.f32 %v1276, %v1278
      %1398 = vadd.xlane.f32.xlu0 %v1397
      %v1399 = vpop.xlane.xlu0 %1398
      %v1400 = vadd.f32 %v1280, %v1282
      %1401 = vadd.xlane.f32.xlu0 %v1400
      %v1402 = vpop.xlane.xlu0 %1401
      %v1403 = vadd.f32 %v1284, %v1286
      %1404 = vadd.xlane.f32.xlu0 %v1403
      %v1405 = vpop.xlane.xlu0 %1404
      %v1406 = vadd.f32 %v1288, %v1290
      %1407 = vadd.xlane.f32.xlu0 %v1406
      %v1408 = vpop.xlane.xlu0 %1407
      %v1409 = vadd.f32 %v1292, %v1294
      %1410 = vadd.xlane.f32.xlu0 %v1409
      %v1411 = vpop.xlane.xlu0 %1410
      %v1412 = vadd.f32 %v1296, %v1298
      %1413 = vadd.xlane.f32.xlu0 %v1412
      %v1414 = vpop.xlane.xlu0 %1413
      %v1415 = vadd.f32 %v1300, %v1302
      %1416 = vadd.xlane.f32.xlu0 %v1415
      %v1417 = vpop.xlane.xlu0 %1416
      %v1418 = vadd.f32 %v1304, %v1306
      %1419 = vadd.xlane.f32.xlu0 %v1418
      %v1420 = vpop.xlane.xlu0 %1419
      %v1421 = vadd.f32 %v1308, %v1310
      %1422 = vadd.xlane.f32.xlu0 %v1421
      %v1423 = vpop.xlane.xlu0 %1422
      %v1424 = vadd.f32 %v1312, %v1314
      %1425 = vadd.xlane.f32.xlu0 %v1424
      %v1426 = vpop.xlane.xlu0 %1425
      %v1427 = vadd.f32 %v1316, %v1318
      %1428 = vadd.xlane.f32.xlu0 %v1427
      %v1429 = vpop.xlane.xlu0 %1428
      %v1430 = vadd.f32 %v1320, %v1322
      %1431 = vadd.xlane.f32.xlu0 %v1430
      %v1432 = vpop.xlane.xlu0 %1431
      %v1433 = vadd.f32 %v1324, %v1326
      %1434 = vadd.xlane.f32.xlu0 %v1433
      %v1435 = vpop.xlane.xlu0 %1434
      %v1436 = vadd.f32 %v1328, %v1330
      %1437 = vadd.xlane.f32.xlu0 %v1436
      %v1438 = vpop.xlane.xlu0 %1437
      %v1439 = vadd.f32 %v1332, %v1334
      %1440 = vadd.xlane.f32.xlu0 %v1439
      %v1441 = vpop.xlane.xlu0 %1440
      %v1442 = vadd.f32 %v1336, %v1338
      %1443 = vadd.xlane.f32.xlu0 %v1442
      %v1444 = vpop.xlane.xlu0 %1443
      %v1445 = vadd.f32 %v1340, %v1342
      %1446 = vadd.xlane.f32.xlu0 %v1445
      %v1447 = vpop.xlane.xlu0 %1446
      %v1448 = vadd.f32 %v1344, %v1346
      %1449 = vadd.xlane.f32.xlu0 %v1448
      %v1450 = vpop.xlane.xlu0 %1449
      %v1451 = vadd.f32 %v1348, %v1350
      %1452 = vadd.xlane.f32.xlu0 %v1451
      %v1453 = vpop.xlane.xlu0 %1452
      %v1454 = vadd.f32 %v1352, %v1354
      %1455 = vadd.xlane.f32.xlu0 %v1454
      %v1456 = vpop.xlane.xlu0 %1455
      %v1457 = vadd.f32 %v1356, %v1358
      %1458 = vadd.xlane.f32.xlu0 %v1457
      %v1459 = vpop.xlane.xlu0 %1458
      %v1460 = vadd.f32 %v1360, %v1362
      %1461 = vadd.xlane.f32.xlu0 %v1460
      %v1462 = vpop.xlane.xlu0 %1461
      %v1463 = vadd.f32 %v1364, %v1366
      %1464 = vadd.xlane.f32.xlu0 %v1463
      %v1465 = vpop.xlane.xlu0 %1464
      %v1466 = vadd.f32 %v1368, %v1370
      %1467 = vadd.xlane.f32.xlu0 %v1466
      %v1468 = vpop.xlane.xlu0 %1467
      %v1469 = vadd.f32 %v1372, %v1374
      %1470 = vadd.xlane.f32.xlu0 %v1469
      %v1471 = vpop.xlane.xlu0 %1470
      %v1472 = vadd.f32 %v1376, %v1378
      %1473 = vadd.xlane.f32.xlu0 %v1472
      %v1474 = vpop.xlane.xlu0 %1473
      %v1475 = vrcp.pop %v1381
      %v1476 = vmul.f32 %v1381, %v1475
      %v1477 = vsub.f32 1.0, %v1476
      %v1478 = vmul.f32 %v1475, %v1477
      %v1479 = vadd.f32 %v1475, %v1478
      %vm1480 = vweird.f32 %v1381
      %vm1481 = vweird.f32 %v1475
      %vm1482 = vmor %vm1480, %vm1481
      %v1483 = vsel %vm1482, %v1475, %v1479
      %v1484 = vand.u32 2147483647, %v1381
      %vm1485 = vcmp.eq.f32.partialorder %v1484, 8.507059e+37
      %v1486 = vand.u32 %v1381, 2147483648
      %v1487 = vor.u32 1.1754944e-38, %v1486
      %v1488 = vsel %vm1485, %v1487, %v1483
      %v1489 = vmul.f32 %v1252, %v1488
      %v1490 = vmul.f32 %v1254, %v1488
      %v1491 = vrcp.pop %v1384
      %v1492 = vmul.f32 %v1384, %v1491
      %v1493 = vsub.f32 1.0, %v1492
      %v1494 = vmul.f32 %v1491, %v1493
      %v1495 = vadd.f32 %v1491, %v1494
      %vm1496 = vweird.f32 %v1384
      %vm1497 = vweird.f32 %v1491
      %vm1498 = vmor %vm1496, %vm1497
      %v1499 = vsel %vm1498, %v1491, %v1495
      %v1500 = vand.u32 2147483647, %v1384
      %vm1501 = vcmp.eq.f32.partialorder %v1500, 8.507059e+37
      %v1502 = vand.u32 %v1384, 2147483648
      %v1503 = vor.u32 1.1754944e-38, %v1502
      %v1504 = vsel %vm1501, %v1503, %v1499
      %v1505 = vmul.f32 %v1256, %v1504
      %v1506 = vmul.f32 %v1258, %v1504
      %v1507 = vrcp.pop %v1387
      %v1508 = vmul.f32 %v1387, %v1507
      %v1509 = vsub.f32 1.0, %v1508
      %v1510 = vmul.f32 %v1507, %v1509
      %v1511 = vadd.f32 %v1507, %v1510
      %vm1512 = vweird.f32 %v1387
      %vm1513 = vweird.f32 %v1507
      %vm1514 = vmor %vm1512, %vm1513
      %v1515 = vsel %vm1514, %v1507, %v1511
      %v1516 = vand.u32 2147483647, %v1387
      %vm1517 = vcmp.eq.f32.partialorder %v1516, 8.507059e+37
      %v1518 = vand.u32 %v1387, 2147483648
      %v1519 = vor.u32 1.1754944e-38, %v1518
      %v1520 = vsel %vm1517, %v1519, %v1515
      %v1521 = vmul.f32 %v1260, %v1520
      %v1522 = vmul.f32 %v1262, %v1520
      %v1523 = vrcp.pop %v1390
      %v1524 = vmul.f32 %v1390, %v1523
      %v1525 = vsub.f32 1.0, %v1524
      %v1526 = vmul.f32 %v1523, %v1525
      %v1527 = vadd.f32 %v1523, %v1526
      %vm1528 = vweird.f32 %v1390
      %vm1529 = vweird.f32 %v1523
      %vm1530 = vmor %vm1528, %vm1529
      %v1531 = vsel %vm1530, %v1523, %v1527
      %v1532 = vand.u32 2147483647, %v1390
      %vm1533 = vcmp.eq.f32.partialorder %v1532, 8.507059e+37
      %v1534 = vand.u32 %v1390, 2147483648
      %v1535 = vor.u32 1.1754944e-38, %v1534
      %v1536 = vsel %vm1533, %v1535, %v1531
      %v1537 = vmul.f32 %v1264, %v1536
      %v1538 = vmul.f32 %v1266, %v1536
      %v1539 = vrcp.pop %v1393
      %v1540 = vmul.f32 %v1393, %v1539
      %v1541 = vsub.f32 1.0, %v1540
      %v1542 = vmul.f32 %v1539, %v1541
      %v1543 = vadd.f32 %v1539, %v1542
      %vm1544 = vweird.f32 %v1393
      %vm1545 = vweird.f32 %v1539
      %vm1546 = vmor %vm1544, %vm1545
      %v1547 = vsel %vm1546, %v1539, %v1543
      %v1548 = vand.u32 2147483647, %v1393
      %vm1549 = vcmp.eq.f32.partialorder %v1548, 8.507059e+37
      %v1550 = vand.u32 %v1393, 2147483648
      %v1551 = vor.u32 1.1754944e-38, %v1550
      %v1552 = vsel %vm1549, %v1551, %v1547
      %v1553 = vmul.f32 %v1268, %v1552
      %v1554 = vmul.f32 %v1270, %v1552
      %v1555 = vrcp.pop %v1396
      %v1556 = vmul.f32 %v1396, %v1555
      %v1557 = vsub.f32 1.0, %v1556
      %v1558 = vmul.f32 %v1555, %v1557
      %v1559 = vadd.f32 %v1555, %v1558
      %vm1560 = vweird.f32 %v1396
      %vm1561 = vweird.f32 %v1555
      %vm1562 = vmor %vm1560, %vm1561
      %v1563 = vsel %vm1562, %v1555, %v1559
      %v1564 = vand.u32 2147483647, %v1396
      %vm1565 = vcmp.eq.f32.partialorder %v1564, 8.507059e+37
      %v1566 = vand.u32 %v1396, 2147483648
      %v1567 = vor.u32 1.1754944e-38, %v1566
      %v1568 = vsel %vm1565, %v1567, %v1563
      %v1569 = vmul.f32 %v1272, %v1568
      %v1570 = vmul.f32 %v1274, %v1568
      %v1571 = vrcp.pop %v1399
      %v1572 = vmul.f32 %v1399, %v1571
      %v1573 = vsub.f32 1.0, %v1572
      %v1574 = vmul.f32 %v1571, %v1573
      %v1575 = vadd.f32 %v1571, %v1574
      %vm1576 = vweird.f32 %v1399
      %vm1577 = vweird.f32 %v1571
      %vm1578 = vmor %vm1576, %vm1577
      %v1579 = vsel %vm1578, %v1571, %v1575
      %v1580 = vand.u32 2147483647, %v1399
      %vm1581 = vcmp.eq.f32.partialorder %v1580, 8.507059e+37
      %v1582 = vand.u32 %v1399, 2147483648
      %v1583 = vor.u32 1.1754944e-38, %v1582
      %v1584 = vsel %vm1581, %v1583, %v1579
      %v1585 = vmul.f32 %v1276, %v1584
      %v1586 = vmul.f32 %v1278, %v1584
      %v1587 = vrcp.pop %v1402
      %v1588 = vmul.f32 %v1402, %v1587
      %v1589 = vsub.f32 1.0, %v1588
      %v1590 = vmul.f32 %v1587, %v1589
      %v1591 = vadd.f32 %v1587, %v1590
      %vm1592 = vweird.f32 %v1402
      %vm1593 = vweird.f32 %v1587
      %vm1594 = vmor %vm1592, %vm1593
      %v1595 = vsel %vm1594, %v1587, %v1591
      %v1596 = vand.u32 2147483647, %v1402
      %vm1597 = vcmp.eq.f32.partialorder %v1596, 8.507059e+37
      %v1598 = vand.u32 %v1402, 2147483648
      %v1599 = vor.u32 1.1754944e-38, %v1598
      %v1600 = vsel %vm1597, %v1599, %v1595
      %v1601 = vmul.f32 %v1280, %v1600
      %v1602 = vmul.f32 %v1282, %v1600
      %v1603 = vrcp.pop %v1405
      %v1604 = vmul.f32 %v1405, %v1603
      %v1605 = vsub.f32 1.0, %v1604
      %v1606 = vmul.f32 %v1603, %v1605
      %v1607 = vadd.f32 %v1603, %v1606
      %vm1608 = vweird.f32 %v1405
      %vm1609 = vweird.f32 %v1603
      %vm1610 = vmor %vm1608, %vm1609
      %v1611 = vsel %vm1610, %v1603, %v1607
      %v1612 = vand.u32 2147483647, %v1405
      %vm1613 = vcmp.eq.f32.partialorder %v1612, 8.507059e+37
      %v1614 = vand.u32 %v1405, 2147483648
      %v1615 = vor.u32 1.1754944e-38, %v1614
      %v1616 = vsel %vm1613, %v1615, %v1611
      %v1617 = vmul.f32 %v1284, %v1616
      %v1618 = vmul.f32 %v1286, %v1616
      %v1619 = vrcp.pop %v1408
      %v1620 = vmul.f32 %v1408, %v1619
      %v1621 = vsub.f32 1.0, %v1620
      %v1622 = vmul.f32 %v1619, %v1621
      %v1623 = vadd.f32 %v1619, %v1622
      %vm1624 = vweird.f32 %v1408
      %vm1625 = vweird.f32 %v1619
      %vm1626 = vmor %vm1624, %vm1625
      %v1627 = vsel %vm1626, %v1619, %v1623
      %v1628 = vand.u32 2147483647, %v1408
      %vm1629 = vcmp.eq.f32.partialorder %v1628, 8.507059e+37
      %v1630 = vand.u32 %v1408, 2147483648
      %v1631 = vor.u32 1.1754944e-38, %v1630
      %v1632 = vsel %vm1629, %v1631, %v1627
      %v1633 = vmul.f32 %v1288, %v1632
      %v1634 = vmul.f32 %v1290, %v1632
      %v1635 = vrcp.pop %v1411
      %v1636 = vmul.f32 %v1411, %v1635
      %v1637 = vsub.f32 1.0, %v1636
      %v1638 = vmul.f32 %v1635, %v1637
      %v1639 = vadd.f32 %v1635, %v1638
      %vm1640 = vweird.f32 %v1411
      %vm1641 = vweird.f32 %v1635
      %vm1642 = vmor %vm1640, %vm1641
      %v1643 = vsel %vm1642, %v1635, %v1639
      %v1644 = vand.u32 2147483647, %v1411
      %vm1645 = vcmp.eq.f32.partialorder %v1644, 8.507059e+37
      %v1646 = vand.u32 %v1411, 2147483648
      %v1647 = vor.u32 1.1754944e-38, %v1646
      %v1648 = vsel %vm1645, %v1647, %v1643
      %v1649 = vmul.f32 %v1292, %v1648
      %v1650 = vmul.f32 %v1294, %v1648
      %v1651 = vrcp.pop %v1414
      %v1652 = vmul.f32 %v1414, %v1651
      %v1653 = vsub.f32 1.0, %v1652
      %v1654 = vmul.f32 %v1651, %v1653
      %v1655 = vadd.f32 %v1651, %v1654
      %vm1656 = vweird.f32 %v1414
      %vm1657 = vweird.f32 %v1651
      %vm1658 = vmor %vm1656, %vm1657
      %v1659 = vsel %vm1658, %v1651, %v1655
      %v1660 = vand.u32 2147483647, %v1414
      %vm1661 = vcmp.eq.f32.partialorder %v1660, 8.507059e+37
      %v1662 = vand.u32 %v1414, 2147483648
      %v1663 = vor.u32 1.1754944e-38, %v1662
      %v1664 = vsel %vm1661, %v1663, %v1659
      %v1665 = vmul.f32 %v1296, %v1664
      %v1666 = vmul.f32 %v1298, %v1664
      %v1667 = vrcp.pop %v1417
      %v1668 = vmul.f32 %v1417, %v1667
      %v1669 = vsub.f32 1.0, %v1668
      %v1670 = vmul.f32 %v1667, %v1669
      %v1671 = vadd.f32 %v1667, %v1670
      %vm1672 = vweird.f32 %v1417
      %vm1673 = vweird.f32 %v1667
      %vm1674 = vmor %vm1672, %vm1673
      %v1675 = vsel %vm1674, %v1667, %v1671
      %v1676 = vand.u32 2147483647, %v1417
      %vm1677 = vcmp.eq.f32.partialorder %v1676, 8.507059e+37
      %v1678 = vand.u32 %v1417, 2147483648
      %v1679 = vor.u32 1.1754944e-38, %v1678
      %v1680 = vsel %vm1677, %v1679, %v1675
      %v1681 = vmul.f32 %v1300, %v1680
      %v1682 = vmul.f32 %v1302, %v1680
      %v1683 = vrcp.pop %v1420
      %v1684 = vmul.f32 %v1420, %v1683
      %v1685 = vsub.f32 1.0, %v1684
      %v1686 = vmul.f32 %v1683, %v1685
      %v1687 = vadd.f32 %v1683, %v1686
      %vm1688 = vweird.f32 %v1420
      %vm1689 = vweird.f32 %v1683
      %vm1690 = vmor %vm1688, %vm1689
      %v1691 = vsel %vm1690, %v1683, %v1687
      %v1692 = vand.u32 2147483647, %v1420
      %vm1693 = vcmp.eq.f32.partialorder %v1692, 8.507059e+37
      %v1694 = vand.u32 %v1420, 2147483648
      %v1695 = vor.u32 1.1754944e-38, %v1694
      %v1696 = vsel %vm1693, %v1695, %v1691
      %v1697 = vmul.f32 %v1304, %v1696
      %v1698 = vmul.f32 %v1306, %v1696
      %v1699 = vrcp.pop %v1423
      %v1700 = vmul.f32 %v1423, %v1699
      %v1701 = vsub.f32 1.0, %v1700
      %v1702 = vmul.f32 %v1699, %v1701
      %v1703 = vadd.f32 %v1699, %v1702
      %vm1704 = vweird.f32 %v1423
      %vm1705 = vweird.f32 %v1699
      %vm1706 = vmor %vm1704, %vm1705
      %v1707 = vsel %vm1706, %v1699, %v1703
      %v1708 = vand.u32 2147483647, %v1423
      %vm1709 = vcmp.eq.f32.partialorder %v1708, 8.507059e+37
      %v1710 = vand.u32 %v1423, 2147483648
      %v1711 = vor.u32 1.1754944e-38, %v1710
      %v1712 = vsel %vm1709, %v1711, %v1707
      %v1713 = vmul.f32 %v1308, %v1712
      %v1714 = vmul.f32 %v1310, %v1712
      %v1715 = vrcp.pop %v1426
      %v1716 = vmul.f32 %v1426, %v1715
      %v1717 = vsub.f32 1.0, %v1716
      %v1718 = vmul.f32 %v1715, %v1717
      %v1719 = vadd.f32 %v1715, %v1718
      %vm1720 = vweird.f32 %v1426
      %vm1721 = vweird.f32 %v1715
      %vm1722 = vmor %vm1720, %vm1721
      %v1723 = vsel %vm1722, %v1715, %v1719
      %v1724 = vand.u32 2147483647, %v1426
      %vm1725 = vcmp.eq.f32.partialorder %v1724, 8.507059e+37
      %v1726 = vand.u32 %v1426, 2147483648
      %v1727 = vor.u32 1.1754944e-38, %v1726
      %v1728 = vsel %vm1725, %v1727, %v1723
      %v1729 = vmul.f32 %v1312, %v1728
      %v1730 = vmul.f32 %v1314, %v1728
      %v1731 = vrcp.pop %v1429
      %v1732 = vmul.f32 %v1429, %v1731
      %v1733 = vsub.f32 1.0, %v1732
      %v1734 = vmul.f32 %v1731, %v1733
      %v1735 = vadd.f32 %v1731, %v1734
      %vm1736 = vweird.f32 %v1429
      %vm1737 = vweird.f32 %v1731
      %vm1738 = vmor %vm1736, %vm1737
      %v1739 = vsel %vm1738, %v1731, %v1735
      %v1740 = vand.u32 2147483647, %v1429
      %vm1741 = vcmp.eq.f32.partialorder %v1740, 8.507059e+37
      %v1742 = vand.u32 %v1429, 2147483648
      %v1743 = vor.u32 1.1754944e-38, %v1742
      %v1744 = vsel %vm1741, %v1743, %v1739
      %v1745 = vmul.f32 %v1316, %v1744
      %v1746 = vmul.f32 %v1318, %v1744
      %v1747 = vrcp.pop %v1432
      %v1748 = vmul.f32 %v1432, %v1747
      %v1749 = vsub.f32 1.0, %v1748
      %v1750 = vmul.f32 %v1747, %v1749
      %v1751 = vadd.f32 %v1747, %v1750
      %vm1752 = vweird.f32 %v1432
      %vm1753 = vweird.f32 %v1747
      %vm1754 = vmor %vm1752, %vm1753
      %v1755 = vsel %vm1754, %v1747, %v1751
      %v1756 = vand.u32 2147483647, %v1432
      %vm1757 = vcmp.eq.f32.partialorder %v1756, 8.507059e+37
      %v1758 = vand.u32 %v1432, 2147483648
      %v1759 = vor.u32 1.1754944e-38, %v1758
      %v1760 = vsel %vm1757, %v1759, %v1755
      %v1761 = vmul.f32 %v1320, %v1760
      %v1762 = vmul.f32 %v1322, %v1760
      %v1763 = vrcp.pop %v1435
      %v1764 = vmul.f32 %v1435, %v1763
      %v1765 = vsub.f32 1.0, %v1764
      %v1766 = vmul.f32 %v1763, %v1765
      %v1767 = vadd.f32 %v1763, %v1766
      %vm1768 = vweird.f32 %v1435
      %vm1769 = vweird.f32 %v1763
      %vm1770 = vmor %vm1768, %vm1769
      %v1771 = vsel %vm1770, %v1763, %v1767
      %v1772 = vand.u32 2147483647, %v1435
      %vm1773 = vcmp.eq.f32.partialorder %v1772, 8.507059e+37
      %v1774 = vand.u32 %v1435, 2147483648
      %v1775 = vor.u32 1.1754944e-38, %v1774
      %v1776 = vsel %vm1773, %v1775, %v1771
      %v1777 = vmul.f32 %v1324, %v1776
      %v1778 = vmul.f32 %v1326, %v1776
      %v1779 = vrcp.pop %v1438
      %v1780 = vmul.f32 %v1438, %v1779
      %v1781 = vsub.f32 1.0, %v1780
      %v1782 = vmul.f32 %v1779, %v1781
      %v1783 = vadd.f32 %v1779, %v1782
      %vm1784 = vweird.f32 %v1438
      %vm1785 = vweird.f32 %v1779
      %vm1786 = vmor %vm1784, %vm1785
      %v1787 = vsel %vm1786, %v1779, %v1783
      %v1788 = vand.u32 2147483647, %v1438
      %vm1789 = vcmp.eq.f32.partialorder %v1788, 8.507059e+37
      %v1790 = vand.u32 %v1438, 2147483648
      %v1791 = vor.u32 1.1754944e-38, %v1790
      %v1792 = vsel %vm1789, %v1791, %v1787
      %v1793 = vmul.f32 %v1328, %v1792
      %v1794 = vmul.f32 %v1330, %v1792
      %v1795 = vrcp.pop %v1441
      %v1796 = vmul.f32 %v1441, %v1795
      %v1797 = vsub.f32 1.0, %v1796
      %v1798 = vmul.f32 %v1795, %v1797
      %v1799 = vadd.f32 %v1795, %v1798
      %vm1800 = vweird.f32 %v1441
      %vm1801 = vweird.f32 %v1795
      %vm1802 = vmor %vm1800, %vm1801
      %v1803 = vsel %vm1802, %v1795, %v1799
      %v1804 = vand.u32 2147483647, %v1441
      %vm1805 = vcmp.eq.f32.partialorder %v1804, 8.507059e+37
      %v1806 = vand.u32 %v1441, 2147483648
      %v1807 = vor.u32 1.1754944e-38, %v1806
      %v1808 = vsel %vm1805, %v1807, %v1803
      %v1809 = vmul.f32 %v1332, %v1808
      %v1810 = vmul.f32 %v1334, %v1808
      %v1811 = vrcp.pop %v1444
      %v1812 = vmul.f32 %v1444, %v1811
      %v1813 = vsub.f32 1.0, %v1812
      %v1814 = vmul.f32 %v1811, %v1813
      %v1815 = vadd.f32 %v1811, %v1814
      %vm1816 = vweird.f32 %v1444
      %vm1817 = vweird.f32 %v1811
      %vm1818 = vmor %vm1816, %vm1817
      %v1819 = vsel %vm1818, %v1811, %v1815
      %v1820 = vand.u32 2147483647, %v1444
      %vm1821 = vcmp.eq.f32.partialorder %v1820, 8.507059e+37
      %v1822 = vand.u32 %v1444, 2147483648
      %v1823 = vor.u32 1.1754944e-38, %v1822
      %v1824 = vsel %vm1821, %v1823, %v1819
      %v1825 = vmul.f32 %v1336, %v1824
      %v1826 = vmul.f32 %v1338, %v1824
      %v1827 = vrcp.pop %v1447
      %v1828 = vmul.f32 %v1447, %v1827
      %v1829 = vsub.f32 1.0, %v1828
      %v1830 = vmul.f32 %v1827, %v1829
      %v1831 = vadd.f32 %v1827, %v1830
      %vm1832 = vweird.f32 %v1447
      %vm1833 = vweird.f32 %v1827
      %vm1834 = vmor %vm1832, %vm1833
      %v1835 = vsel %vm1834, %v1827, %v1831
      %v1836 = vand.u32 2147483647, %v1447
      %vm1837 = vcmp.eq.f32.partialorder %v1836, 8.507059e+37
      %v1838 = vand.u32 %v1447, 2147483648
      %v1839 = vor.u32 1.1754944e-38, %v1838
      %v1840 = vsel %vm1837, %v1839, %v1835
      %v1841 = vmul.f32 %v1340, %v1840
      %v1842 = vmul.f32 %v1342, %v1840
      %v1843 = vrcp.pop %v1450
      %v1844 = vmul.f32 %v1450, %v1843
      %v1845 = vsub.f32 1.0, %v1844
      %v1846 = vmul.f32 %v1843, %v1845
      %v1847 = vadd.f32 %v1843, %v1846
      %vm1848 = vweird.f32 %v1450
      %vm1849 = vweird.f32 %v1843
      %vm1850 = vmor %vm1848, %vm1849
      %v1851 = vsel %vm1850, %v1843, %v1847
      %v1852 = vand.u32 2147483647, %v1450
      %vm1853 = vcmp.eq.f32.partialorder %v1852, 8.507059e+37
      %v1854 = vand.u32 %v1450, 2147483648
      %v1855 = vor.u32 1.1754944e-38, %v1854
      %v1856 = vsel %vm1853, %v1855, %v1851
      %v1857 = vmul.f32 %v1344, %v1856
      %v1858 = vmul.f32 %v1346, %v1856
      %v1859 = vrcp.pop %v1453
      %v1860 = vmul.f32 %v1453, %v1859
      %v1861 = vsub.f32 1.0, %v1860
      %v1862 = vmul.f32 %v1859, %v1861
      %v1863 = vadd.f32 %v1859, %v1862
      %vm1864 = vweird.f32 %v1453
      %vm1865 = vweird.f32 %v1859
      %vm1866 = vmor %vm1864, %vm1865
      %v1867 = vsel %vm1866, %v1859, %v1863
      %v1868 = vand.u32 2147483647, %v1453
      %vm1869 = vcmp.eq.f32.partialorder %v1868, 8.507059e+37
      %v1870 = vand.u32 %v1453, 2147483648
      %v1871 = vor.u32 1.1754944e-38, %v1870
      %v1872 = vsel %vm1869, %v1871, %v1867
      %v1873 = vmul.f32 %v1348, %v1872
      %v1874 = vmul.f32 %v1350, %v1872
      %v1875 = vrcp.pop %v1456
      %v1876 = vmul.f32 %v1456, %v1875
      %v1877 = vsub.f32 1.0, %v1876
      %v1878 = vmul.f32 %v1875, %v1877
      %v1879 = vadd.f32 %v1875, %v1878
      %vm1880 = vweird.f32 %v1456
      %vm1881 = vweird.f32 %v1875
      %vm1882 = vmor %vm1880, %vm1881
      %v1883 = vsel %vm1882, %v1875, %v1879
      %v1884 = vand.u32 2147483647, %v1456
      %vm1885 = vcmp.eq.f32.partialorder %v1884, 8.507059e+37
      %v1886 = vand.u32 %v1456, 2147483648
      %v1887 = vor.u32 1.1754944e-38, %v1886
      %v1888 = vsel %vm1885, %v1887, %v1883
      %v1889 = vmul.f32 %v1352, %v1888
      %v1890 = vmul.f32 %v1354, %v1888
      %v1891 = vrcp.pop %v1459
      %v1892 = vmul.f32 %v1459, %v1891
      %v1893 = vsub.f32 1.0, %v1892
      %v1894 = vmul.f32 %v1891, %v1893
      %v1895 = vadd.f32 %v1891, %v1894
      %vm1896 = vweird.f32 %v1459
      %vm1897 = vweird.f32 %v1891
      %vm1898 = vmor %vm1896, %vm1897
      %v1899 = vsel %vm1898, %v1891, %v1895
      %v1900 = vand.u32 2147483647, %v1459
      %vm1901 = vcmp.eq.f32.partialorder %v1900, 8.507059e+37
      %v1902 = vand.u32 %v1459, 2147483648
      %v1903 = vor.u32 1.1754944e-38, %v1902
      %v1904 = vsel %vm1901, %v1903, %v1899
      %v1905 = vmul.f32 %v1356, %v1904
      %v1906 = vmul.f32 %v1358, %v1904
      %v1907 = vrcp.pop %v1462
      %v1908 = vmul.f32 %v1462, %v1907
      %v1909 = vsub.f32 1.0, %v1908
      %v1910 = vmul.f32 %v1907, %v1909
      %v1911 = vadd.f32 %v1907, %v1910
      %vm1912 = vweird.f32 %v1462
      %vm1913 = vweird.f32 %v1907
      %vm1914 = vmor %vm1912, %vm1913
      %v1915 = vsel %vm1914, %v1907, %v1911
      %v1916 = vand.u32 2147483647, %v1462
      %vm1917 = vcmp.eq.f32.partialorder %v1916, 8.507059e+37
      %v1918 = vand.u32 %v1462, 2147483648
      %v1919 = vor.u32 1.1754944e-38, %v1918
      %v1920 = vsel %vm1917, %v1919, %v1915
      %v1921 = vmul.f32 %v1360, %v1920
      %v1922 = vmul.f32 %v1362, %v1920
      %v1923 = vrcp.pop %v1465
      %v1924 = vmul.f32 %v1465, %v1923
      %v1925 = vsub.f32 1.0, %v1924
      %v1926 = vmul.f32 %v1923, %v1925
      %v1927 = vadd.f32 %v1923, %v1926
      %vm1928 = vweird.f32 %v1465
      %vm1929 = vweird.f32 %v1923
      %vm1930 = vmor %vm1928, %vm1929
      %v1931 = vsel %vm1930, %v1923, %v1927
      %v1932 = vand.u32 2147483647, %v1465
      %vm1933 = vcmp.eq.f32.partialorder %v1932, 8.507059e+37
      %v1934 = vand.u32 %v1465, 2147483648
      %v1935 = vor.u32 1.1754944e-38, %v1934
      %v1936 = vsel %vm1933, %v1935, %v1931
      %v1937 = vmul.f32 %v1364, %v1936
      %v1938 = vmul.f32 %v1366, %v1936
      %v1939 = vrcp.pop %v1468
      %v1940 = vmul.f32 %v1468, %v1939
      %v1941 = vsub.f32 1.0, %v1940
      %v1942 = vmul.f32 %v1939, %v1941
      %v1943 = vadd.f32 %v1939, %v1942
      %vm1944 = vweird.f32 %v1468
      %vm1945 = vweird.f32 %v1939
      %vm1946 = vmor %vm1944, %vm1945
      %v1947 = vsel %vm1946, %v1939, %v1943
      %v1948 = vand.u32 2147483647, %v1468
      %vm1949 = vcmp.eq.f32.partialorder %v1948, 8.507059e+37
      %v1950 = vand.u32 %v1468, 2147483648
      %v1951 = vor.u32 1.1754944e-38, %v1950
      %v1952 = vsel %vm1949, %v1951, %v1947
      %v1953 = vmul.f32 %v1368, %v1952
      %v1954 = vmul.f32 %v1370, %v1952
      %v1955 = vrcp.pop %v1471
      %v1956 = vmul.f32 %v1471, %v1955
      %v1957 = vsub.f32 1.0, %v1956
      %v1958 = vmul.f32 %v1955, %v1957
      %v1959 = vadd.f32 %v1955, %v1958
      %vm1960 = vweird.f32 %v1471
      %vm1961 = vweird.f32 %v1955
      %vm1962 = vmor %vm1960, %vm1961
      %v1963 = vsel %vm1962, %v1955, %v1959
      %v1964 = vand.u32 2147483647, %v1471
      %vm1965 = vcmp.eq.f32.partialorder %v1964, 8.507059e+37
      %v1966 = vand.u32 %v1471, 2147483648
      %v1967 = vor.u32 1.1754944e-38, %v1966
      %v1968 = vsel %vm1965, %v1967, %v1963
      %v1969 = vmul.f32 %v1372, %v1968
      %v1970 = vmul.f32 %v1374, %v1968
      %v1971 = vrcp.pop %v1474
      %v1972 = vmul.f32 %v1474, %v1971
      %v1973 = vsub.f32 1.0, %v1972
      %v1974 = vmul.f32 %v1971, %v1973
      %v1975 = vadd.f32 %v1971, %v1974
      %vm1976 = vweird.f32 %v1474
      %vm1977 = vweird.f32 %v1971
      %vm1978 = vmor %vm1976, %vm1977
      %v1979 = vsel %vm1978, %v1971, %v1975
      %v1980 = vand.u32 2147483647, %v1474
      %vm1981 = vcmp.eq.f32.partialorder %v1980, 8.507059e+37
      %v1982 = vand.u32 %v1474, 2147483648
      %v1983 = vor.u32 1.1754944e-38, %v1982
      %v1984 = vsel %vm1981, %v1983, %v1979
      %v1985 = vmul.f32 %v1376, %v1984
      %v1986 = vmul.f32 %v1378, %v1984
      %1987 = vmatpush.xpose.msra.mxu0 %v1729
      %1988 = vmatpush.xpose.msra.mxu0 %v1713
      %1989 = vmatpush.xpose.msra.mxu0 %v1697
      %1990 = vmatpush.xpose.msra.mxu0 %v1681
      %1991 = vmatpush.xpose.msra.mxu0 %v1665
      %1992 = vmatpush.xpose.msra.mxu0 %v1649
      %1993 = vmatpush.xpose.msra.mxu0 %v1633
      %1994 = vmatpush.xpose.msra.mxu0 %v1617
      %1995 = vmatpush.xpose.msra.mxu0 %v1601
      %1996 = vmatpush.xpose.msra.mxu0 %v1585
      %1997 = vmatpush.xpose.msra.mxu0 %v1569
      %1998 = vmatpush.xpose.msra.mxu0 %v1553
      %1999 = vmatpush.xpose.msra.mxu0 %v1537
      %2000 = vmatpush.xpose.msra.mxu0 %v1521
      %2001 = vmatpush.xpose.msra.mxu0 %v1505
      %2002 = vmatpush.xpose.msra.mxu0 %v1489
      %2003 = vmatmul.f32.gmra.mxu0 %v721
      %v2004 = vpop.f32.mrf.mxu0
      %v2005 = vadd.f32 0.0, %v2004
      %2006 = vmatmul.f32.gmra.mxu0 %v724
      %v2007 = vpop.f32.mrf.mxu0
      %v2008 = vadd.f32 0.0, %v2007
      %2009 = vmatmul.f32.gmra.mxu0 %v727
      %v2010 = vpop.f32.mrf.mxu0
      %v2011 = vadd.f32 0.0, %v2010
      %2012 = vmatmul.f32.gmra.mxu0 %v730
      %v2013 = vpop.f32.mrf.mxu0
      %v2014 = vadd.f32 0.0, %v2013
      %2015 = vdwg.mxu0
      %2016 = vmatpush.xpose.msra.mxu0 %v1730
      %2017 = vmatpush.xpose.msra.mxu0 %v1714
      %2018 = vmatpush.xpose.msra.mxu0 %v1698
      %2019 = vmatpush.xpose.msra.mxu0 %v1682
      %2020 = vmatpush.xpose.msra.mxu0 %v1666
      %2021 = vmatpush.xpose.msra.mxu0 %v1650
      %2022 = vmatpush.xpose.msra.mxu0 %v1634
      %2023 = vmatpush.xpose.msra.mxu0 %v1618
      %2024 = vmatpush.xpose.msra.mxu0 %v1602
      %2025 = vmatpush.xpose.msra.mxu0 %v1586
      %2026 = vmatpush.xpose.msra.mxu0 %v1570
      %2027 = vmatpush.xpose.msra.mxu0 %v1554
      %2028 = vmatpush.xpose.msra.mxu0 %v1538
      %2029 = vmatpush.xpose.msra.mxu0 %v1522
      %2030 = vmatpush.xpose.msra.mxu0 %v1506
      %2031 = vmatpush.xpose.msra.mxu0 %v1490
      %2032 = vmatmul.f32.gmra.mxu0 %v750
      %v2033 = vpop.f32.mrf.mxu0
      %v2034 = vadd.f32 %v2005, %v2033
      %2035 = vmatmul.f32.gmra.mxu0 %v753
      %v2036 = vpop.f32.mrf.mxu0
      %v2037 = vadd.f32 %v2008, %v2036
      %2038 = vmatmul.f32.gmra.mxu0 %v756
      %v2039 = vpop.f32.mrf.mxu0
      %v2040 = vadd.f32 %v2011, %v2039
      %2041 = vmatmul.f32.gmra.mxu0 %v759
      %v2042 = vpop.f32.mrf.mxu0
      %v2043 = vadd.f32 %v2014, %v2042
      %2044 = vdwg.mxu0
      %2045 = vmatpush.xpose.msra.mxu0 %v1985
      %2046 = vmatpush.xpose.msra.mxu0 %v1969
      %2047 = vmatpush.xpose.msra.mxu0 %v1953
      %2048 = vmatpush.xpose.msra.mxu0 %v1937
      %2049 = vmatpush.xpose.msra.mxu0 %v1921
      %2050 = vmatpush.xpose.msra.mxu0 %v1905
      %2051 = vmatpush.xpose.msra.mxu0 %v1889
      %2052 = vmatpush.xpose.msra.mxu0 %v1873
      %2053 = vmatpush.xpose.msra.mxu0 %v1857
      %2054 = vmatpush.xpose.msra.mxu0 %v1841
      %2055 = vmatpush.xpose.msra.mxu0 %v1825
      %2056 = vmatpush.xpose.msra.mxu0 %v1809
      %2057 = vmatpush.xpose.msra.mxu0 %v1793
      %2058 = vmatpush.xpose.msra.mxu0 %v1777
      %2059 = vmatpush.xpose.msra.mxu0 %v1761
      %2060 = vmatpush.xpose.msra.mxu0 %v1745
      %2061 = vmatmul.f32.gmra.mxu0 %v721
      %v2062 = vpop.f32.mrf.mxu0
      %v2063 = vadd.f32 0.0, %v2062
      %2064 = vmatmul.f32.gmra.mxu0 %v724
      %v2065 = vpop.f32.mrf.mxu0
      %v2066 = vadd.f32 0.0, %v2065
      %2067 = vmatmul.f32.gmra.mxu0 %v727
      %v2068 = vpop.f32.mrf.mxu0
      %v2069 = vadd.f32 0.0, %v2068
      %2070 = vmatmul.f32.gmra.mxu0 %v730
      %v2071 = vpop.f32.mrf.mxu0
      %v2072 = vadd.f32 0.0, %v2071
      %2073 = vdwg.mxu0
      %2074 = vmatpush.xpose.msra.mxu0 %v1986
      %2075 = vmatpush.xpose.msra.mxu0 %v1970
      %2076 = vmatpush.xpose.msra.mxu0 %v1954
      %2077 = vmatpush.xpose.msra.mxu0 %v1938
      %2078 = vmatpush.xpose.msra.mxu0 %v1922
      %2079 = vmatpush.xpose.msra.mxu0 %v1906
      %2080 = vmatpush.xpose.msra.mxu0 %v1890
      %2081 = vmatpush.xpose.msra.mxu0 %v1874
      %2082 = vmatpush.xpose.msra.mxu0 %v1858
      %2083 = vmatpush.xpose.msra.mxu0 %v1842
      %2084 = vmatpush.xpose.msra.mxu0 %v1826
      %2085 = vmatpush.xpose.msra.mxu0 %v1810
      %2086 = vmatpush.xpose.msra.mxu0 %v1794
      %2087 = vmatpush.xpose.msra.mxu0 %v1778
      %2088 = vmatpush.xpose.msra.mxu0 %v1762
      %2089 = vmatpush.xpose.msra.mxu0 %v1746
      %2090 = vmatmul.f32.gmra.mxu0 %v750
      %v2091 = vpop.f32.mrf.mxu0
      %v2092 = vadd.f32 %v2063, %v2091
      %2093 = vmatmul.f32.gmra.mxu0 %v753
      %v2094 = vpop.f32.mrf.mxu0
      %v2095 = vadd.f32 %v2066, %v2094
      %2096 = vmatmul.f32.gmra.mxu0 %v756
      %v2097 = vpop.f32.mrf.mxu0
      %v2098 = vadd.f32 %v2069, %v2097
      %2099 = vmatmul.f32.gmra.mxu0 %v759
      %v2100 = vpop.f32.mrf.mxu0
      %v2101 = vadd.f32 %v2072, %v2100
      %2102 = vdwg.mxu0
      %v2103 = vld [vmem:[#allocation2] sm:$0x1]
      %v2105 = vperm.slane %v2103, 0
      %2106 = vset.pattern.permute.xlu0 0
      %2107 = vperm.xlu0 %2106, %v2105
      %v2108 = vpop.permute.xlu0 %2107
      %v2110 = vmul.f32 %v2108, %v2034
      %v2111 = vmul.f32 %v2108, %v2092
      %v2112 = vmul.f32 %v2108, %v2037
      %v2113 = vmul.f32 %v2108, %v2095
      %v2114 = vmul.f32 %v2108, %v2040
      %v2115 = vmul.f32 %v2108, %v2098
      %v2116 = vmul.f32 %v2108, %v2043
      %v2117 = vmul.f32 %v2108, %v2101
      %v2118 = vadd.f32 %v2110, %v355
      %v2119 = vadd.f32 %v2111, %v356
      %v2120 = vadd.f32 %v2112, %v357
      %v2121 = vadd.f32 %v2113, %v358
      %v2122 = vadd.f32 %v2114, %v359
      %v2123 = vadd.f32 %v2115, %v360
      %v2124 = vadd.f32 %v2116, %v361
      %v2125 = vadd.f32 %v2117, %v362
      %2126 = vst [vmem:[%s354] sm:$0xff] %v2118
      %2127 = vst [vmem:[%s354 + $0x8] sm:$0xff] %v2119
      %2128 = vst [vmem:[%s354 + $0x10] sm:$0xff] %v2120
      %2129 = vst [vmem:[%s354 + $0x18] sm:$0xff] %v2121
      %2130 = vst [vmem:[%s354 + $0x20] sm:$0xff] %v2122
      %2131 = vst [vmem:[%s354 + $0x28] sm:$0xff] %v2123
      %2132 = vst [vmem:[%s354 + $0x30] sm:$0xff] %v2124
      %2133 = vst [vmem:[%s354 + $0x38] sm:$0xff] %v2125
      %p2134 = scmp.lt.s32.totalorder %s22, 1
      %s2135 = scalar_select %p2134, %s22, 1
      %s2136 = smul.addr %s2135, 8
      %s2137 = smul.addr %s2136, 8
      %s2138 = scalar_lea.vmem %s9, %s2137
      // Predicated region
      $region57: #{_lambda_.1} parent=55 // pred_check
        %p2139 = pneg %p239
      $region58: #{_lambda_.1} parent=55 // pred_check_branch
        %2141 = sbr.rel (%p2139) target = $region60
      $region59: #{_lambda_.1} parent=55 // pred_region
        _
      $region60: #{_lambda_.1} parent=55 // pred_fallthru
        _
    $region56: #{_lambda_.1} parent=5 // pred_fallthru
      _
    %p2142 = scmp.le.s32.totalorder 2, %s17
    // Predicated region
    $region61: #{_lambda_.1} parent=5 // pred_check
      %p2143 = pneg %p2142
    $region62: #{_lambda_.1} parent=5 // pred_check_branch
      %2145 = sbr.rel (%p2143) target = $region64
    $region63: #{_lambda_.1} parent=5 // pred_region
      %s2146 = ssub.s32 %s17, 2
      // Predicated region
      $region65: #{_lambda_.1} parent=63 // pred_check
        %p2147 = pneg %p245
      $region66: #{_lambda_.1} parent=63 // pred_check_branch
        %2149 = sbr.rel (%p2147) target = $region68
      $region67: #{_lambda_.1} parent=63 // pred_region
        %p2150 = scmp.lt.s32.totalorder %s23, 1
        %s2151 = scalar_select %p2150, %s23, 1
        %s2152 = smul.addr %s2151, 8
        %s2153 = smul.addr %s2152, 8
        %s2154 = scalar_lea.vmem %s9, %s2153
      $region68: #{_lambda_.1} parent=63 // pred_fallthru
        _
    $region64: #{_lambda_.1} parent=5 // pred_fallthru
      _
  $region6: #{_lambda_.1} parent=0 // loop_footer
    %s21 = sadd.s32 1, %s17
  $region7: #{_lambda_.1} parent=0 // loop_footer_branch
    %16 = sbr.rel target = $region3
  $region8: #{_lambda_.1} parent=0 // loop_exit
    _

</llo_original>
